<compile_context>
chip_gen: v5e
topology: v5e:2x2
jax: 0.10.0
libtpu: 0.0.40
codegen_flags: <defaults>
</compile_context>

<pallas_src>
import functools

import jax
import jax.numpy as jnp
from jax.experimental import pallas as pl
from jax.experimental.pallas import tpu as pltpu


def _round_up(x, m):
    return (x + m - 1) // m * m


def _cdiv(a, b):
    return -(-a // b)


# ---------------------------------------------------------------------------
# Kernel 1: flat-spatial path (small images, Wp <= 128).
# ---------------------------------------------------------------------------
def _flat_conv_kernel(x_ref, w_ref, o_ref, *, cin, cout, k, wp, s_out):
    """x_ref: (1, Cin, S_in, 128) reflect-padded input, spatial flattened
              row-major with row stride Wp (zero-padded at the tail).
       w_ref: (Cout*Cin*K*K,) f32 SMEM, PyTorch OIHW order.
       o_ref: (1, Cout, S_out, 128) flat output (row stride Wp)."""
    lane = jax.lax.broadcasted_iota(jnp.int32, (s_out, 128), 1)
    accs = [jnp.zeros((s_out, 128), dtype=jnp.float32) for _ in range(cout)]

    for ci in range(cin):
        xp = x_ref[0, ci]                               # (S_in, 128)
        views = {}                                      # sublane-shifted views, shared by q
        for kh in range(k):
            for kw in range(k):
                d = kh * wp + kw                        # flat tap offset (static)
                q, r = divmod(d, 128)
                if r == 0:
                    if q not in views:
                        views[q] = xp[q:q + s_out, :]
                    tap = views[q]
                else:
                    for qq in (q, q + 1):
                        if qq not in views:
                            views[qq] = xp[qq:qq + s_out, :]
                    # tap[s, l] = flat[s*128 + l + d]: lane roll with carry
                    # into the next sublane, realized as two rolls + select.
                    lo = pltpu.roll(views[q], 128 - r, axis=1)
                    hi = pltpu.roll(views[q + 1], 128 - r, axis=1)
                    tap = jnp.where(lane < 128 - r, lo, hi)
                base = (ci * k + kh) * k + kw
                for co in range(cout):
                    wgt = w_ref[co * cin * k * k + base]     # SMEM scalar read
                    accs[co] = accs[co] + wgt * tap          # VPU FMA, lane-dense

    for co in range(cout):
        # EUP tanh + unmasked 128-lane stores.
        o_ref[0, co] = jnp.tanh(accs[co]).astype(o_ref.dtype)


# ---------------------------------------------------------------------------
# Kernel 2: general path (W on lanes, row-blocked grid).
# ---------------------------------------------------------------------------
def _rows_conv_kernel(x_ref, w_ref, o_ref, *, cin, cout, k, th, thp_al):
    """x_ref: (1, Cin, Hp_al, Wp_al) whole reflect-padded image (resident:
              its index_map ignores the row-block axis, so it is DMA'd only
              when the batch index changes).
       o_ref: (1, Cout, TH, W_al) output row block."""
    wp_al = x_ref.shape[3]
    w_al = o_ref.shape[3]
    row0 = pl.multiple_of(pl.program_id(1) * th, 8)     # aligned dynamic offset

    accs = [jnp.zeros((th, w_al), dtype=jnp.float32) for _ in range(cout)]
    for ci in range(cin):
        xp = x_ref[0, ci, pl.ds(row0, thp_al), :]       # (THp_al, Wp_al), halo included
        for kh in range(k):
            # kh (sublane) roll hoisted out of the kw loop: K*K -> K+K*K' rolls.
            xh = xp if kh == 0 else pltpu.roll(xp, thp_al - kh, axis=0)
            for kw in range(k):
                # NOTE: when Wp_al == W_al the lane roll wraps, but the wrapped
                # values only land in lanes >= W, which the wrapper crops.
                xw = xh if kw == 0 else pltpu.roll(xh, wp_al - kw, axis=1)
                tap = xw[:th, :w_al]                    # aligned prefix slice
                base = (ci * k + kh) * k + kw
                for co in range(cout):
                    wgt = w_ref[co * cin * k * k + base]
                    accs[co] = accs[co] + wgt * tap

    for co in range(cout):
        o_ref[0, co] = jnp.tanh(accs[co]).astype(o_ref.dtype)


def _pick_row_block(h_al, w_al, cout, budget_bytes=64 * 1024):
    """Largest multiple of 8 dividing h_al whose Cout f32 accumulators fit."""
    cap = max(8, (budget_bytes // (4 * cout * w_al)) // 8 * 8)
    th = 8
    for c in range(8, min(h_al, 256) + 1, 8):
        if h_al % c == 0 and c <= cap:
            th = c
    return th


# ---------------------------------------------------------------------------
# Wrapper
# ---------------------------------------------------------------------------
def output_forward(x, weight, kernel_size=3):
    """Forward pass of `Output` (NCHW in / NCHW out).

    Args:
      x:      (B, Cin, H, W) input.
      weight: (Cout, Cin, K, K) conv weight, PyTorch layout, no bias.
    Returns:
      (B, Cout, H, W) = tanh(conv2d(reflection_pad(x), weight)).
    """
    B, Cin, H, W = x.shape
    Cout = weight.shape[0]
    K = kernel_size
    p = K // 2

    # Reflection padding as plain slice+concat (cheap XLA ops; no gather).
    x_pad = jnp.pad(x.astype(jnp.float32),
                    ((0, 0), (0, 0), (p, p), (p, p)), mode="reflect")
    Hp, Wp = H + 2 * p, W + 2 * p
    w_flat = weight.astype(jnp.float32).reshape(-1)     # SMEM scalars
    flops = 2 * B * H * W * Cin * Cout * K * K

    s_out = _cdiv(H * Wp, 128)
    use_flat = (Wp <= 128) and (Cout * s_out * 128 * 4 <= 96 * 1024)

    if use_flat:
        # ----------------- flat-spatial path (small images) ----------------
        dmax = (K - 1) * Wp + (K - 1)                   # largest tap offset
        s_in = _cdiv(s_out * 128 + dmax, 128) + 1       # +1 sublane for 'hi' views
        x_flat = x_pad.reshape(B, Cin, Hp * Wp)
        x_flat = jnp.pad(x_flat, ((0, 0), (0, 0), (0, s_in * 128 - Hp * Wp)))
        x_flat = x_flat.reshape(B, Cin, s_in, 128)

        kernel = functools.partial(_flat_conv_kernel, cin=Cin, cout=Cout, k=K,
                                   wp=Wp, s_out=s_out)
        out = pl.pallas_call(
            kernel,
            out_shape=jax.ShapeDtypeStruct((B, Cout, s_out, 128), jnp.float32),
            grid_spec=pltpu.PrefetchScalarGridSpec(
                num_scalar_prefetch=0,
                grid=(B,),          # B parallel points (>=2 for megacore when B>=2)
                in_specs=[
                    pl.BlockSpec((1, Cin, s_in, 128), lambda b: (b, 0, 0, 0)),
                    pl.BlockSpec(memory_space=pltpu.MemorySpace.SMEM),
                ],
                out_specs=pl.BlockSpec((1, Cout, s_out, 128),
                                       lambda b: (b, 0, 0, 0)),
            ),
            compiler_params=pltpu.CompilerParams(
                dimension_semantics=("parallel",),
                vmem_limit_bytes=32 * 1024 * 1024),
            cost_estimate=pl.CostEstimate(
                flops=flops,
                transcendentals=B * Cout * s_out * 128,
                bytes_accessed=4 * (x_flat.size + w_flat.size
                                    + B * Cout * s_out * 128)),
        )(x_flat, w_flat)
        # Crop the stride-Wp flat rows back to (H, W): only ~(Wp/W - 1) overhead.
        out = out.reshape(B, Cout, s_out * 128)[:, :, :H * Wp]
        out = out.reshape(B, Cout, H, Wp)[:, :, :, :W]
        return out.astype(x.dtype)

    # ----------------- general path (W on lanes, row blocks) ---------------
    W_al = _round_up(W, 128)
    Wp_al = _round_up(Wp, 128)
    H_al = _round_up(H, 8)                     # pad rows instead of TH=H fallback
    TH = _pick_row_block(H_al, W_al, Cout)
    NH = H_al // TH
    THp_al = _round_up(TH + 2 * p, 8)
    Hp_al = H_al + (THp_al - TH)               # rows the last block may touch
    x_big = jnp.pad(x_pad, ((0, 0), (0, 0), (0, Hp_al - Hp), (0, Wp_al - Wp)))

    in_bytes = Cin * Hp_al * Wp_al * 4
    out_bytes = Cout * TH * W_al * 4
    vmem_limit = int(min(max(2 * (in_bytes + out_bytes) + (4 << 20), 32 << 20),
                         64 << 20))
    # TODO(synk): for very large images (resident padded input > ~24 MiB,
    # i.e. > v7x VMEM comfort zone) switch to manual double-buffered
    # row-window DMA (memory_space=pl.ANY + make_async_copy).

    kernel = functools.partial(_rows_conv_kernel, cin=Cin, cout=Cout, k=K,
                               th=TH, thp_al=THp_al)
    out = pl.pallas_call(
        kernel,
        out_shape=jax.ShapeDtypeStruct((B, Cout, H_al, W_al), jnp.float32),
        grid_spec=pltpu.PrefetchScalarGridSpec(
            num_scalar_prefetch=0,
            grid=(B, NH),
            in_specs=[
                # Whole padded image; index_map ignores j -> resident per batch.
                pl.BlockSpec((1, Cin, Hp_al, Wp_al), lambda b, j: (b, 0, 0, 0)),
                pl.BlockSpec(memory_space=pltpu.MemorySpace.SMEM),
            ],
            out_specs=pl.BlockSpec((1, Cout, TH, W_al),
                                   lambda b, j: (b, 0, j, 0)),
        ),
        compiler_params=pltpu.CompilerParams(
            dimension_semantics=("parallel", "parallel"),
            vmem_limit_bytes=vmem_limit),
        cost_estimate=pl.CostEstimate(
            flops=flops,
            transcendentals=B * Cout * H_al * W_al,
            bytes_accessed=4 * (x_big.size + w_flat.size
                                + B * Cout * H_al * W_al)),
    )(x_big, w_flat)
    return out[:, :, :H, :W].astype(x.dtype)


# ---------------------------------------------------------------------------
# Pure-JAX reference (reflection pad + conv + tanh) for the correctness check.
# ---------------------------------------------------------------------------
def _reference_forward(x_nchw, weight_oihw, kernel_size=3):
    pad = kernel_size // 2
    x_pad = jnp.pad(x_nchw, ((0, 0), (0, 0), (pad, pad), (pad, pad)),
                    mode="reflect")
    y = jax.lax.conv_general_dilated(
        x_pad, weight_oihw,
        window_strides=(1, 1), padding="VALID",
        dimension_numbers=("NCHW", "OIHW", "NCHW"),
        precision=jax.lax.Precision.HIGHEST)
    return jnp.tanh(y)


if __name__ == "__main__":
    key = jax.random.PRNGKey(0)
    k_x, k_w = jax.random.split(key)

    B, Cin, Cout, H, W, K = 2, 4, 3, 16, 16, 3

    x = jax.random.normal(k_x, (B, Cin, H, W), dtype=jnp.float32)
    # Deterministic conv weight (no bias, per module __init__).
    weight = jax.random.normal(k_w, (Cout, Cin, K, K), dtype=jnp.float32) * 0.1

    out = output_forward(x, weight, kernel_size=K)
    out = jax.block_until_ready(out)

    ref = _reference_forward(x, weight, kernel_size=K)
    assert out.shape == (B, Cout, H, W)
    assert jnp.allclose(out, ref, atol=1e-5, rtol=1e-5), "mismatch vs reference"

    print("KERNEL_OK")
</pallas_src>

<mosaic_0001>
module attributes {stable_mosaic.version = 11 : i64} {
  func.func @_flat_conv_kernel(%arg0: i32, %arg1: memref<1x4x5x128xf32, #tpu.memory_space<vmem>>, %arg2: memref<108xf32, #tpu.memory_space<smem>>, %arg3: memref<1x3x3x128xf32, #tpu.memory_space<vmem>>) attributes {dimension_semantics = [#tpu.dimension_semantics<parallel>], iteration_bounds = array<i64: 2>, scalar_prefetch = 0 : i64, scratch_operands = 0 : i64, tpu.core_type = #tpu.core_type<tc>, window_params = [{transform_indices = @transform_0, window_bounds = array<i64: 1, 4, 5, 128>}, {transform_indices = @transform_1, window_bounds = array<i64: 108>}, {transform_indices = @transform_2, window_bounds = array<i64: 1, 3, 3, 128>}]} {
    %0 = tpu.iota {dimensions = array<i32: 1>} : vector<3x128xi32>
    %cst = arith.constant 0.000000e+00 : f32
    %1 = vector.broadcast %cst : f32 to vector<3x128xf32>
    %cst_0 = arith.constant 0.000000e+00 : f32
    %2 = vector.broadcast %cst_0 : f32 to vector<3x128xf32>
    %cst_1 = arith.constant 0.000000e+00 : f32
    %3 = vector.broadcast %cst_1 : f32 to vector<3x128xf32>
    %c0 = arith.constant 0 : index
    %c0_2 = arith.constant 0 : index
    %c0_3 = arith.constant 0 : index
    %c0_4 = arith.constant 0 : index
    %4 = vector.load %arg1[%c0, %c0_2, %c0_3, %c0_4] : memref<1x4x5x128xf32, #tpu.memory_space<vmem>>, vector<1x1x5x128xf32>
    %5 = vector.shape_cast %4 : vector<1x1x5x128xf32> to vector<5x128xf32>
    %6 = vector.extract_strided_slice %5 {offsets = [0, 0], sizes = [3, 128], strides = [1, 1]} : vector<5x128xf32> to vector<3x128xf32>
    %c0_5 = arith.constant 0 : index
    %7 = memref.load %arg2[%c0_5] : memref<108xf32, #tpu.memory_space<smem>>
    %8 = vector.broadcast %7 : f32 to vector<3x128xf32>
    %9 = arith.mulf %8, %6 : vector<3x128xf32>
    %10 = arith.addf %1, %9 : vector<3x128xf32>
    %c36 = arith.constant 36 : index
    %11 = memref.load %arg2[%c36] : memref<108xf32, #tpu.memory_space<smem>>
    %12 = vector.broadcast %11 : f32 to vector<3x128xf32>
    %13 = arith.mulf %12, %6 : vector<3x128xf32>
    %14 = arith.addf %2, %13 : vector<3x128xf32>
    %c72 = arith.constant 72 : index
    %15 = memref.load %arg2[%c72] : memref<108xf32, #tpu.memory_space<smem>>
    %16 = vector.broadcast %15 : f32 to vector<3x128xf32>
    %17 = arith.mulf %16, %6 : vector<3x128xf32>
    %18 = arith.addf %3, %17 : vector<3x128xf32>
    %19 = vector.extract_strided_slice %5 {offsets = [1, 0], sizes = [3, 128], strides = [1, 1]} : vector<5x128xf32> to vector<3x128xf32>
    %c127_i32 = arith.constant 127 : i32
    %20 = tpu.dynamic_rotate %6 by %c127_i32 dim 1 : vector<3x128xf32>, i32 -> vector<3x128xf32>
    %c127_i32_6 = arith.constant 127 : i32
    %21 = tpu.dynamic_rotate %19 by %c127_i32_6 dim 1 : vector<3x128xf32>, i32 -> vector<3x128xf32>
    %c127_i32_7 = arith.constant 127 : i32
    %22 = vector.broadcast %c127_i32_7 : i32 to vector<3x128xi32>
    %23 = arith.cmpi slt, %0, %22 : vector<3x128xi32>
    %24 = arith.select %23, %20, %21 : vector<3x128xi1>, vector<3x128xf32>
    %c1 = arith.constant 1 : index
    %25 = memref.load %arg2[%c1] : memref<108xf32, #tpu.memory_space<smem>>
    %26 = vector.broadcast %25 : f32 to vector<3x128xf32>
    %27 = arith.mulf %26, %24 : vector<3x128xf32>
    %28 = arith.addf %10, %27 : vector<3x128xf32>
    %c37 = arith.constant 37 : index
    %29 = memref.load %arg2[%c37] : memref<108xf32, #tpu.memory_space<smem>>
    %30 = vector.broadcast %29 : f32 to vector<3x128xf32>
    %31 = arith.mulf %30, %24 : vector<3x128xf32>
    %32 = arith.addf %14, %31 : vector<3x128xf32>
    %c73 = arith.constant 73 : index
    %33 = memref.load %arg2[%c73] : memref<108xf32, #tpu.memory_space<smem>>
    %34 = vector.broadcast %33 : f32 to vector<3x128xf32>
    %35 = arith.mulf %34, %24 : vector<3x128xf32>
    %36 = arith.addf %18, %35 : vector<3x128xf32>
    %c126_i32 = arith.constant 126 : i32
    %37 = tpu.dynamic_rotate %6 by %c126_i32 dim 1 : vector<3x128xf32>, i32 -> vector<3x128xf32>
    %c126_i32_8 = arith.constant 126 : i32
    %38 = tpu.dynamic_rotate %19 by %c126_i32_8 dim 1 : vector<3x128xf32>, i32 -> vector<3x128xf32>
    %c126_i32_9 = arith.constant 126 : i32
    %39 = vector.broadcast %c126_i32_9 : i32 to vector<3x128xi32>
    %40 = arith.cmpi slt, %0, %39 : vector<3x128xi32>
    %41 = arith.select %40, %37, %38 : vector<3x128xi1>, vector<3x128xf32>
    %c2 = arith.constant 2 : index
    %42 = memref.load %arg2[%c2] : memref<108xf32, #tpu.memory_space<smem>>
    %43 = vector.broadcast %42 : f32 to vector<3x128xf32>
    %44 = arith.mulf %43, %41 : vector<3x128xf32>
    %45 = arith.addf %28, %44 : vector<3x128xf32>
    %c38 = arith.constant 38 : index
    %46 = memref.load %arg2[%c38] : memref<108xf32, #tpu.memory_space<smem>>
    %47 = vector.broadcast %46 : f32 to vector<3x128xf32>
    %48 = arith.mulf %47, %41 : vector<3x128xf32>
    %49 = arith.addf %32, %48 : vector<3x128xf32>
    %c74 = arith.constant 74 : index
    %50 = memref.load %arg2[%c74] : memref<108xf32, #tpu.memory_space<smem>>
    %51 = vector.broadcast %50 : f32 to vector<3x128xf32>
    %52 = arith.mulf %51, %41 : vector<3x128xf32>
    %53 = arith.addf %36, %52 : vector<3x128xf32>
    %c110_i32 = arith.constant 110 : i32
    %54 = tpu.dynamic_rotate %6 by %c110_i32 dim 1 : vector<3x128xf32>, i32 -> vector<3x128xf32>
    %c110_i32_10 = arith.constant 110 : i32
    %55 = tpu.dynamic_rotate %19 by %c110_i32_10 dim 1 : vector<3x128xf32>, i32 -> vector<3x128xf32>
    %c110_i32_11 = arith.constant 110 : i32
    %56 = vector.broadcast %c110_i32_11 : i32 to vector<3x128xi32>
    %57 = arith.cmpi slt, %0, %56 : vector<3x128xi32>
    %58 = arith.select %57, %54, %55 : vector<3x128xi1>, vector<3x128xf32>
    %c3 = arith.constant 3 : index
    %59 = memref.load %arg2[%c3] : memref<108xf32, #tpu.memory_space<smem>>
    %60 = vector.broadcast %59 : f32 to vector<3x128xf32>
    %61 = arith.mulf %60, %58 : vector<3x128xf32>
    %62 = arith.addf %45, %61 : vector<3x128xf32>
    %c39 = arith.constant 39 : index
    %63 = memref.load %arg2[%c39] : memref<108xf32, #tpu.memory_space<smem>>
    %64 = vector.broadcast %63 : f32 to vector<3x128xf32>
    %65 = arith.mulf %64, %58 : vector<3x128xf32>
    %66 = arith.addf %49, %65 : vector<3x128xf32>
    %c75 = arith.constant 75 : index
    %67 = memref.load %arg2[%c75] : memref<108xf32, #tpu.memory_space<smem>>
    %68 = vector.broadcast %67 : f32 to vector<3x128xf32>
    %69 = arith.mulf %68, %58 : vector<3x128xf32>
    %70 = arith.addf %53, %69 : vector<3x128xf32>
    %c109_i32 = arith.constant 109 : i32
    %71 = tpu.dynamic_rotate %6 by %c109_i32 dim 1 : vector<3x128xf32>, i32 -> vector<3x128xf32>
    %c109_i32_12 = arith.constant 109 : i32
    %72 = tpu.dynamic_rotate %19 by %c109_i32_12 dim 1 : vector<3x128xf32>, i32 -> vector<3x128xf32>
    %c109_i32_13 = arith.constant 109 : i32
    %73 = vector.broadcast %c109_i32_13 : i32 to vector<3x128xi32>
    %74 = arith.cmpi slt, %0, %73 : vector<3x128xi32>
    %75 = arith.select %74, %71, %72 : vector<3x128xi1>, vector<3x128xf32>
    %c4 = arith.constant 4 : index
    %76 = memref.load %arg2[%c4] : memref<108xf32, #tpu.memory_space<smem>>
    %77 = vector.broadcast %76 : f32 to vector<3x128xf32>
    %78 = arith.mulf %77, %75 : vector<3x128xf32>
    %79 = arith.addf %62, %78 : vector<3x128xf32>
    %c40 = arith.constant 40 : index
    %80 = memref.load %arg2[%c40] : memref<108xf32, #tpu.memory_space<smem>>
    %81 = vector.broadcast %80 : f32 to vector<3x128xf32>
    %82 = arith.mulf %81, %75 : vector<3x128xf32>
    %83 = arith.addf %66, %82 : vector<3x128xf32>
    %c76 = arith.constant 76 : index
    %84 = memref.load %arg2[%c76] : memref<108xf32, #tpu.memory_space<smem>>
    %85 = vector.broadcast %84 : f32 to vector<3x128xf32>
    %86 = arith.mulf %85, %75 : vector<3x128xf32>
    %87 = arith.addf %70, %86 : vector<3x128xf32>
    %c108_i32 = arith.constant 108 : i32
    %88 = tpu.dynamic_rotate %6 by %c108_i32 dim 1 : vector<3x128xf32>, i32 -> vector<3x128xf32>
    %c108_i32_14 = arith.constant 108 : i32
    %89 = tpu.dynamic_rotate %19 by %c108_i32_14 dim 1 : vector<3x128xf32>, i32 -> vector<3x128xf32>
    %c108_i32_15 = arith.constant 108 : i32
    %90 = vector.broadcast %c108_i32_15 : i32 to vector<3x128xi32>
    %91 = arith.cmpi slt, %0, %90 : vector<3x128xi32>
    %92 = arith.select %91, %88, %89 : vector<3x128xi1>, vector<3x128xf32>
    %c5 = arith.constant 5 : index
    %93 = memref.load %arg2[%c5] : memref<108xf32, #tpu.memory_space<smem>>
    %94 = vector.broadcast %93 : f32 to vector<3x128xf32>
    %95 = arith.mulf %94, %92 : vector<3x128xf32>
    %96 = arith.addf %79, %95 : vector<3x128xf32>
    %c41 = arith.constant 41 : index
    %97 = memref.load %arg2[%c41] : memref<108xf32, #tpu.memory_space<smem>>
    %98 = vector.broadcast %97 : f32 to vector<3x128xf32>
    %99 = arith.mulf %98, %92 : vector<3x128xf32>
    %100 = arith.addf %83, %99 : vector<3x128xf32>
    %c77 = arith.constant 77 : index
    %101 = memref.load %arg2[%c77] : memref<108xf32, #tpu.memory_space<smem>>
    %102 = vector.broadcast %101 : f32 to vector<3x128xf32>
    %103 = arith.mulf %102, %92 : vector<3x128xf32>
    %104 = arith.addf %87, %103 : vector<3x128xf32>
    %c92_i32 = arith.constant 92 : i32
    %105 = tpu.dynamic_rotate %6 by %c92_i32 dim 1 : vector<3x128xf32>, i32 -> vector<3x128xf32>
    %c92_i32_16 = arith.constant 92 : i32
    %106 = tpu.dynamic_rotate %19 by %c92_i32_16 dim 1 : vector<3x128xf32>, i32 -> vector<3x128xf32>
    %c92_i32_17 = arith.constant 92 : i32
    %107 = vector.broadcast %c92_i32_17 : i32 to vector<3x128xi32>
    %108 = arith.cmpi slt, %0, %107 : vector<3x128xi32>
    %109 = arith.select %108, %105, %106 : vector<3x128xi1>, vector<3x128xf32>
    %c6 = arith.constant 6 : index
    %110 = memref.load %arg2[%c6] : memref<108xf32, #tpu.memory_space<smem>>
    %111 = vector.broadcast %110 : f32 to vector<3x128xf32>
    %112 = arith.mulf %111, %109 : vector<3x128xf32>
    %113 = arith.addf %96, %112 : vector<3x128xf32>
    %c42 = arith.constant 42 : index
    %114 = memref.load %arg2[%c42] : memref<108xf32, #tpu.memory_space<smem>>
    %115 = vector.broadcast %114 : f32 to vector<3x128xf32>
    %116 = arith.mulf %115, %109 : vector<3x128xf32>
    %117 = arith.addf %100, %116 : vector<3x128xf32>
    %c78 = arith.constant 78 : index
    %118 = memref.load %arg2[%c78] : memref<108xf32, #tpu.memory_space<smem>>
    %119 = vector.broadcast %118 : f32 to vector<3x128xf32>
    %120 = arith.mulf %119, %109 : vector<3x128xf32>
    %121 = arith.addf %104, %120 : vector<3x128xf32>
    %c91_i32 = arith.constant 91 : i32
    %122 = tpu.dynamic_rotate %6 by %c91_i32 dim 1 : vector<3x128xf32>, i32 -> vector<3x128xf32>
    %c91_i32_18 = arith.constant 91 : i32
    %123 = tpu.dynamic_rotate %19 by %c91_i32_18 dim 1 : vector<3x128xf32>, i32 -> vector<3x128xf32>
    %c91_i32_19 = arith.constant 91 : i32
    %124 = vector.broadcast %c91_i32_19 : i32 to vector<3x128xi32>
    %125 = arith.cmpi slt, %0, %124 : vector<3x128xi32>
    %126 = arith.select %125, %122, %123 : vector<3x128xi1>, vector<3x128xf32>
    %c7 = arith.constant 7 : index
    %127 = memref.load %arg2[%c7] : memref<108xf32, #tpu.memory_space<smem>>
    %128 = vector.broadcast %127 : f32 to vector<3x128xf32>
    %129 = arith.mulf %128, %126 : vector<3x128xf32>
    %130 = arith.addf %113, %129 : vector<3x128xf32>
    %c43 = arith.constant 43 : index
    %131 = memref.load %arg2[%c43] : memref<108xf32, #tpu.memory_space<smem>>
    %132 = vector.broadcast %131 : f32 to vector<3x128xf32>
    %133 = arith.mulf %132, %126 : vector<3x128xf32>
    %134 = arith.addf %117, %133 : vector<3x128xf32>
    %c79 = arith.constant 79 : index
    %135 = memref.load %arg2[%c79] : memref<108xf32, #tpu.memory_space<smem>>
    %136 = vector.broadcast %135 : f32 to vector<3x128xf32>
    %137 = arith.mulf %136, %126 : vector<3x128xf32>
    %138 = arith.addf %121, %137 : vector<3x128xf32>
    %c90_i32 = arith.constant 90 : i32
    %139 = tpu.dynamic_rotate %6 by %c90_i32 dim 1 : vector<3x128xf32>, i32 -> vector<3x128xf32>
    %c90_i32_20 = arith.constant 90 : i32
    %140 = tpu.dynamic_rotate %19 by %c90_i32_20 dim 1 : vector<3x128xf32>, i32 -> vector<3x128xf32>
    %c90_i32_21 = arith.constant 90 : i32
    %141 = vector.broadcast %c90_i32_21 : i32 to vector<3x128xi32>
    %142 = arith.cmpi slt, %0, %141 : vector<3x128xi32>
    %143 = arith.select %142, %139, %140 : vector<3x128xi1>, vector<3x128xf32>
    %c8 = arith.constant 8 : index
    %144 = memref.load %arg2[%c8] : memref<108xf32, #tpu.memory_space<smem>>
    %145 = vector.broadcast %144 : f32 to vector<3x128xf32>
    %146 = arith.mulf %145, %143 : vector<3x128xf32>
    %147 = arith.addf %130, %146 : vector<3x128xf32>
    %c44 = arith.constant 44 : index
    %148 = memref.load %arg2[%c44] : memref<108xf32, #tpu.memory_space<smem>>
    %149 = vector.broadcast %148 : f32 to vector<3x128xf32>
    %150 = arith.mulf %149, %143 : vector<3x128xf32>
    %151 = arith.addf %134, %150 : vector<3x128xf32>
    %c80 = arith.constant 80 : index
    %152 = memref.load %arg2[%c80] : memref<108xf32, #tpu.memory_space<smem>>
    %153 = vector.broadcast %152 : f32 to vector<3x128xf32>
    %154 = arith.mulf %153, %143 : vector<3x128xf32>
    %155 = arith.addf %138, %154 : vector<3x128xf32>
    %c0_22 = arith.constant 0 : index
    %c1_23 = arith.constant 1 : index
    %c0_24 = arith.constant 0 : index
    %c0_25 = arith.constant 0 : index
    %156 = vector.load %arg1[%c0_22, %c1_23, %c0_24, %c0_25] : memref<1x4x5x128xf32, #tpu.memory_space<vmem>>, vector<1x1x5x128xf32>
    %157 = vector.shape_cast %156 : vector<1x1x5x128xf32> to vector<5x128xf32>
    %158 = vector.extract_strided_slice %157 {offsets = [0, 0], sizes = [3, 128], strides = [1, 1]} : vector<5x128xf32> to vector<3x128xf32>
    %c9 = arith.constant 9 : index
    %159 = memref.load %arg2[%c9] : memref<108xf32, #tpu.memory_space<smem>>
    %160 = vector.broadcast %159 : f32 to vector<3x128xf32>
    %161 = arith.mulf %160, %158 : vector<3x128xf32>
    %162 = arith.addf %147, %161 : vector<3x128xf32>
    %c45 = arith.constant 45 : index
    %163 = memref.load %arg2[%c45] : memref<108xf32, #tpu.memory_space<smem>>
    %164 = vector.broadcast %163 : f32 to vector<3x128xf32>
    %165 = arith.mulf %164, %158 : vector<3x128xf32>
    %166 = arith.addf %151, %165 : vector<3x128xf32>
    %c81 = arith.constant 81 : index
    %167 = memref.load %arg2[%c81] : memref<108xf32, #tpu.memory_space<smem>>
    %168 = vector.broadcast %167 : f32 to vector<3x128xf32>
    %169 = arith.mulf %168, %158 : vector<3x128xf32>
    %170 = arith.addf %155, %169 : vector<3x128xf32>
    %171 = vector.extract_strided_slice %157 {offsets = [1, 0], sizes = [3, 128], strides = [1, 1]} : vector<5x128xf32> to vector<3x128xf32>
    %c127_i32_26 = arith.constant 127 : i32
    %172 = tpu.dynamic_rotate %158 by %c127_i32_26 dim 1 : vector<3x128xf32>, i32 -> vector<3x128xf32>
    %c127_i32_27 = arith.constant 127 : i32
    %173 = tpu.dynamic_rotate %171 by %c127_i32_27 dim 1 : vector<3x128xf32>, i32 -> vector<3x128xf32>
    %c127_i32_28 = arith.constant 127 : i32
    %174 = vector.broadcast %c127_i32_28 : i32 to vector<3x128xi32>
    %175 = arith.cmpi slt, %0, %174 : vector<3x128xi32>
    %176 = arith.select %175, %172, %173 : vector<3x128xi1>, vector<3x128xf32>
    %c10 = arith.constant 10 : index
    %177 = memref.load %arg2[%c10] : memref<108xf32, #tpu.memory_space<smem>>
    %178 = vector.broadcast %177 : f32 to vector<3x128xf32>
    %179 = arith.mulf %178, %176 : vector<3x128xf32>
    %180 = arith.addf %162, %179 : vector<3x128xf32>
    %c46 = arith.constant 46 : index
    %181 = memref.load %arg2[%c46] : memref<108xf32, #tpu.memory_space<smem>>
    %182 = vector.broadcast %181 : f32 to vector<3x128xf32>
    %183 = arith.mulf %182, %176 : vector<3x128xf32>
    %184 = arith.addf %166, %183 : vector<3x128xf32>
    %c82 = arith.constant 82 : index
    %185 = memref.load %arg2[%c82] : memref<108xf32, #tpu.memory_space<smem>>
    %186 = vector.broadcast %185 : f32 to vector<3x128xf32>
    %187 = arith.mulf %186, %176 : vector<3x128xf32>
    %188 = arith.addf %170, %187 : vector<3x128xf32>
    %c126_i32_29 = arith.constant 126 : i32
    %189 = tpu.dynamic_rotate %158 by %c126_i32_29 dim 1 : vector<3x128xf32>, i32 -> vector<3x128xf32>
    %c126_i32_30 = arith.constant 126 : i32
    %190 = tpu.dynamic_rotate %171 by %c126_i32_30 dim 1 : vector<3x128xf32>, i32 -> vector<3x128xf32>
    %c126_i32_31 = arith.constant 126 : i32
    %191 = vector.broadcast %c126_i32_31 : i32 to vector<3x128xi32>
    %192 = arith.cmpi slt, %0, %191 : vector<3x128xi32>
    %193 = arith.select %192, %189, %190 : vector<3x128xi1>, vector<3x128xf32>
    %c11 = arith.constant 11 : index
    %194 = memref.load %arg2[%c11] : memref<108xf32, #tpu.memory_space<smem>>
    %195 = vector.broadcast %194 : f32 to vector<3x128xf32>
    %196 = arith.mulf %195, %193 : vector<3x128xf32>
    %197 = arith.addf %180, %196 : vector<3x128xf32>
    %c47 = arith.constant 47 : index
    %198 = memref.load %arg2[%c47] : memref<108xf32, #tpu.memory_space<smem>>
    %199 = vector.broadcast %198 : f32 to vector<3x128xf32>
    %200 = arith.mulf %199, %193 : vector<3x128xf32>
    %201 = arith.addf %184, %200 : vector<3x128xf32>
    %c83 = arith.constant 83 : index
    %202 = memref.load %arg2[%c83] : memref<108xf32, #tpu.memory_space<smem>>
    %203 = vector.broadcast %202 : f32 to vector<3x128xf32>
    %204 = arith.mulf %203, %193 : vector<3x128xf32>
    %205 = arith.addf %188, %204 : vector<3x128xf32>
    %c110_i32_32 = arith.constant 110 : i32
    %206 = tpu.dynamic_rotate %158 by %c110_i32_32 dim 1 : vector<3x128xf32>, i32 -> vector<3x128xf32>
    %c110_i32_33 = arith.constant 110 : i32
    %207 = tpu.dynamic_rotate %171 by %c110_i32_33 dim 1 : vector<3x128xf32>, i32 -> vector<3x128xf32>
    %c110_i32_34 = arith.constant 110 : i32
    %208 = vector.broadcast %c110_i32_34 : i32 to vector<3x128xi32>
    %209 = arith.cmpi slt, %0, %208 : vector<3x128xi32>
    %210 = arith.select %209, %206, %207 : vector<3x128xi1>, vector<3x128xf32>
    %c12 = arith.constant 12 : index
    %211 = memref.load %arg2[%c12] : memref<108xf32, #tpu.memory_space<smem>>
    %212 = vector.broadcast %211 : f32 to vector<3x128xf32>
    %213 = arith.mulf %212, %210 : vector<3x128xf32>
    %214 = arith.addf %197, %213 : vector<3x128xf32>
    %c48 = arith.constant 48 : index
    %215 = memref.load %arg2[%c48] : memref<108xf32, #tpu.memory_space<smem>>
    %216 = vector.broadcast %215 : f32 to vector<3x128xf32>
    %217 = arith.mulf %216, %210 : vector<3x128xf32>
    %218 = arith.addf %201, %217 : vector<3x128xf32>
    %c84 = arith.constant 84 : index
    %219 = memref.load %arg2[%c84] : memref<108xf32, #tpu.memory_space<smem>>
    %220 = vector.broadcast %219 : f32 to vector<3x128xf32>
    %221 = arith.mulf %220, %210 : vector<3x128xf32>
    %222 = arith.addf %205, %221 : vector<3x128xf32>
    %c109_i32_35 = arith.constant 109 : i32
    %223 = tpu.dynamic_rotate %158 by %c109_i32_35 dim 1 : vector<3x128xf32>, i32 -> vector<3x128xf32>
    %c109_i32_36 = arith.constant 109 : i32
    %224 = tpu.dynamic_rotate %171 by %c109_i32_36 dim 1 : vector<3x128xf32>, i32 -> vector<3x128xf32>
    %c109_i32_37 = arith.constant 109 : i32
    %225 = vector.broadcast %c109_i32_37 : i32 to vector<3x128xi32>
    %226 = arith.cmpi slt, %0, %225 : vector<3x128xi32>
    %227 = arith.select %226, %223, %224 : vector<3x128xi1>, vector<3x128xf32>
    %c13 = arith.constant 13 : index
    %228 = memref.load %arg2[%c13] : memref<108xf32, #tpu.memory_space<smem>>
    %229 = vector.broadcast %228 : f32 to vector<3x128xf32>
    %230 = arith.mulf %229, %227 : vector<3x128xf32>
    %231 = arith.addf %214, %230 : vector<3x128xf32>
    %c49 = arith.constant 49 : index
    %232 = memref.load %arg2[%c49] : memref<108xf32, #tpu.memory_space<smem>>
    %233 = vector.broadcast %232 : f32 to vector<3x128xf32>
    %234 = arith.mulf %233, %227 : vector<3x128xf32>
    %235 = arith.addf %218, %234 : vector<3x128xf32>
    %c85 = arith.constant 85 : index
    %236 = memref.load %arg2[%c85] : memref<108xf32, #tpu.memory_space<smem>>
    %237 = vector.broadcast %236 : f32 to vector<3x128xf32>
    %238 = arith.mulf %237, %227 : vector<3x128xf32>
    %239 = arith.addf %222, %238 : vector<3x128xf32>
    %c108_i32_38 = arith.constant 108 : i32
    %240 = tpu.dynamic_rotate %158 by %c108_i32_38 dim 1 : vector<3x128xf32>, i32 -> vector<3x128xf32>
    %c108_i32_39 = arith.constant 108 : i32
    %241 = tpu.dynamic_rotate %171 by %c108_i32_39 dim 1 : vector<3x128xf32>, i32 -> vector<3x128xf32>
    %c108_i32_40 = arith.constant 108 : i32
    %242 = vector.broadcast %c108_i32_40 : i32 to vector<3x128xi32>
    %243 = arith.cmpi slt, %0, %242 : vector<3x128xi32>
    %244 = arith.select %243, %240, %241 : vector<3x128xi1>, vector<3x128xf32>
    %c14 = arith.constant 14 : index
    %245 = memref.load %arg2[%c14] : memref<108xf32, #tpu.memory_space<smem>>
    %246 = vector.broadcast %245 : f32 to vector<3x128xf32>
    %247 = arith.mulf %246, %244 : vector<3x128xf32>
    %248 = arith.addf %231, %247 : vector<3x128xf32>
    %c50 = arith.constant 50 : index
    %249 = memref.load %arg2[%c50] : memref<108xf32, #tpu.memory_space<smem>>
    %250 = vector.broadcast %249 : f32 to vector<3x128xf32>
    %251 = arith.mulf %250, %244 : vector<3x128xf32>
    %252 = arith.addf %235, %251 : vector<3x128xf32>
    %c86 = arith.constant 86 : index
    %253 = memref.load %arg2[%c86] : memref<108xf32, #tpu.memory_space<smem>>
    %254 = vector.broadcast %253 : f32 to vector<3x128xf32>
    %255 = arith.mulf %254, %244 : vector<3x128xf32>
    %256 = arith.addf %239, %255 : vector<3x128xf32>
    %c92_i32_41 = arith.constant 92 : i32
    %257 = tpu.dynamic_rotate %158 by %c92_i32_41 dim 1 : vector<3x128xf32>, i32 -> vector<3x128xf32>
    %c92_i32_42 = arith.constant 92 : i32
    %258 = tpu.dynamic_rotate %171 by %c92_i32_42 dim 1 : vector<3x128xf32>, i32 -> vector<3x128xf32>
    %c92_i32_43 = arith.constant 92 : i32
    %259 = vector.broadcast %c92_i32_43 : i32 to vector<3x128xi32>
    %260 = arith.cmpi slt, %0, %259 : vector<3x128xi32>
    %261 = arith.select %260, %257, %258 : vector<3x128xi1>, vector<3x128xf32>
    %c15 = arith.constant 15 : index
    %262 = memref.load %arg2[%c15] : memref<108xf32, #tpu.memory_space<smem>>
    %263 = vector.broadcast %262 : f32 to vector<3x128xf32>
    %264 = arith.mulf %263, %261 : vector<3x128xf32>
    %265 = arith.addf %248, %264 : vector<3x128xf32>
    %c51 = arith.constant 51 : index
    %266 = memref.load %arg2[%c51] : memref<108xf32, #tpu.memory_space<smem>>
    %267 = vector.broadcast %266 : f32 to vector<3x128xf32>
    %268 = arith.mulf %267, %261 : vector<3x128xf32>
    %269 = arith.addf %252, %268 : vector<3x128xf32>
    %c87 = arith.constant 87 : index
    %270 = memref.load %arg2[%c87] : memref<108xf32, #tpu.memory_space<smem>>
    %271 = vector.broadcast %270 : f32 to vector<3x128xf32>
    %272 = arith.mulf %271, %261 : vector<3x128xf32>
    %273 = arith.addf %256, %272 : vector<3x128xf32>
    %c91_i32_44 = arith.constant 91 : i32
    %274 = tpu.dynamic_rotate %158 by %c91_i32_44 dim 1 : vector<3x128xf32>, i32 -> vector<3x128xf32>
    %c91_i32_45 = arith.constant 91 : i32
    %275 = tpu.dynamic_rotate %171 by %c91_i32_45 dim 1 : vector<3x128xf32>, i32 -> vector<3x128xf32>
    %c91_i32_46 = arith.constant 91 : i32
    %276 = vector.broadcast %c91_i32_46 : i32 to vector<3x128xi32>
    %277 = arith.cmpi slt, %0, %276 : vector<3x128xi32>
    %278 = arith.select %277, %274, %275 : vector<3x128xi1>, vector<3x128xf32>
    %c16 = arith.constant 16 : index
    %279 = memref.load %arg2[%c16] : memref<108xf32, #tpu.memory_space<smem>>
    %280 = vector.broadcast %279 : f32 to vector<3x128xf32>
    %281 = arith.mulf %280, %278 : vector<3x128xf32>
    %282 = arith.addf %265, %281 : vector<3x128xf32>
    %c52 = arith.constant 52 : index
    %283 = memref.load %arg2[%c52] : memref<108xf32, #tpu.memory_space<smem>>
    %284 = vector.broadcast %283 : f32 to vector<3x128xf32>
    %285 = arith.mulf %284, %278 : vector<3x128xf32>
    %286 = arith.addf %269, %285 : vector<3x128xf32>
    %c88 = arith.constant 88 : index
    %287 = memref.load %arg2[%c88] : memref<108xf32, #tpu.memory_space<smem>>
    %288 = vector.broadcast %287 : f32 to vector<3x128xf32>
    %289 = arith.mulf %288, %278 : vector<3x128xf32>
    %290 = arith.addf %273, %289 : vector<3x128xf32>
    %c90_i32_47 = arith.constant 90 : i32
    %291 = tpu.dynamic_rotate %158 by %c90_i32_47 dim 1 : vector<3x128xf32>, i32 -> vector<3x128xf32>
    %c90_i32_48 = arith.constant 90 : i32
    %292 = tpu.dynamic_rotate %171 by %c90_i32_48 dim 1 : vector<3x128xf32>, i32 -> vector<3x128xf32>
    %c90_i32_49 = arith.constant 90 : i32
    %293 = vector.broadcast %c90_i32_49 : i32 to vector<3x128xi32>
    %294 = arith.cmpi slt, %0, %293 : vector<3x128xi32>
    %295 = arith.select %294, %291, %292 : vector<3x128xi1>, vector<3x128xf32>
    %c17 = arith.constant 17 : index
    %296 = memref.load %arg2[%c17] : memref<108xf32, #tpu.memory_space<smem>>
    %297 = vector.broadcast %296 : f32 to vector<3x128xf32>
    %298 = arith.mulf %297, %295 : vector<3x128xf32>
    %299 = arith.addf %282, %298 : vector<3x128xf32>
    %c53 = arith.constant 53 : index
    %300 = memref.load %arg2[%c53] : memref<108xf32, #tpu.memory_space<smem>>
    %301 = vector.broadcast %300 : f32 to vector<3x128xf32>
    %302 = arith.mulf %301, %295 : vector<3x128xf32>
    %303 = arith.addf %286, %302 : vector<3x128xf32>
    %c89 = arith.constant 89 : index
    %304 = memref.load %arg2[%c89] : memref<108xf32, #tpu.memory_space<smem>>
    %305 = vector.broadcast %304 : f32 to vector<3x128xf32>
    %306 = arith.mulf %305, %295 : vector<3x128xf32>
    %307 = arith.addf %290, %306 : vector<3x128xf32>
    %c0_50 = arith.constant 0 : index
    %c2_51 = arith.constant 2 : index
    %c0_52 = arith.constant 0 : index
    %c0_53 = arith.constant 0 : index
    %308 = vector.load %arg1[%c0_50, %c2_51, %c0_52, %c0_53] : memref<1x4x5x128xf32, #tpu.memory_space<vmem>>, vector<1x1x5x128xf32>
    %309 = vector.shape_cast %308 : vector<1x1x5x128xf32> to vector<5x128xf32>
    %310 = vector.extract_strided_slice %309 {offsets = [0, 0], sizes = [3, 128], strides = [1, 1]} : vector<5x128xf32> to vector<3x128xf32>
    %c18 = arith.constant 18 : index
    %311 = memref.load %arg2[%c18] : memref<108xf32, #tpu.memory_space<smem>>
    %312 = vector.broadcast %311 : f32 to vector<3x128xf32>
    %313 = arith.mulf %312, %310 : vector<3x128xf32>
    %314 = arith.addf %299, %313 : vector<3x128xf32>
    %c54 = arith.constant 54 : index
    %315 = memref.load %arg2[%c54] : memref<108xf32, #tpu.memory_space<smem>>
    %316 = vector.broadcast %315 : f32 to vector<3x128xf32>
    %317 = arith.mulf %316, %310 : vector<3x128xf32>
    %318 = arith.addf %303, %317 : vector<3x128xf32>
    %c90 = arith.constant 90 : index
    %319 = memref.load %arg2[%c90] : memref<108xf32, #tpu.memory_space<smem>>
    %320 = vector.broadcast %319 : f32 to vector<3x128xf32>
    %321 = arith.mulf %320, %310 : vector<3x128xf32>
    %322 = arith.addf %307, %321 : vector<3x128xf32>
    %323 = vector.extract_strided_slice %309 {offsets = [1, 0], sizes = [3, 128], strides = [1, 1]} : vector<5x128xf32> to vector<3x128xf32>
    %c127_i32_54 = arith.constant 127 : i32
    %324 = tpu.dynamic_rotate %310 by %c127_i32_54 dim 1 : vector<3x128xf32>, i32 -> vector<3x128xf32>
    %c127_i32_55 = arith.constant 127 : i32
    %325 = tpu.dynamic_rotate %323 by %c127_i32_55 dim 1 : vector<3x128xf32>, i32 -> vector<3x128xf32>
    %c127_i32_56 = arith.constant 127 : i32
    %326 = vector.broadcast %c127_i32_56 : i32 to vector<3x128xi32>
    %327 = arith.cmpi slt, %0, %326 : vector<3x128xi32>
    %328 = arith.select %327, %324, %325 : vector<3x128xi1>, vector<3x128xf32>
    %c19 = arith.constant 19 : index
    %329 = memref.load %arg2[%c19] : memref<108xf32, #tpu.memory_space<smem>>
    %330 = vector.broadcast %329 : f32 to vector<3x128xf32>
    %331 = arith.mulf %330, %328 : vector<3x128xf32>
    %332 = arith.addf %314, %331 : vector<3x128xf32>
    %c55 = arith.constant 55 : index
    %333 = memref.load %arg2[%c55] : memref<108xf32, #tpu.memory_space<smem>>
    %334 = vector.broadcast %333 : f32 to vector<3x128xf32>
    %335 = arith.mulf %334, %328 : vector<3x128xf32>
    %336 = arith.addf %318, %335 : vector<3x128xf32>
    %c91 = arith.constant 91 : index
    %337 = memref.load %arg2[%c91] : memref<108xf32, #tpu.memory_space<smem>>
    %338 = vector.broadcast %337 : f32 to vector<3x128xf32>
    %339 = arith.mulf %338, %328 : vector<3x128xf32>
    %340 = arith.addf %322, %339 : vector<3x128xf32>
    %c126_i32_57 = arith.constant 126 : i32
    %341 = tpu.dynamic_rotate %310 by %c126_i32_57 dim 1 : vector<3x128xf32>, i32 -> vector<3x128xf32>
    %c126_i32_58 = arith.constant 126 : i32
    %342 = tpu.dynamic_rotate %323 by %c126_i32_58 dim 1 : vector<3x128xf32>, i32 -> vector<3x128xf32>
    %c126_i32_59 = arith.constant 126 : i32
    %343 = vector.broadcast %c126_i32_59 : i32 to vector<3x128xi32>
    %344 = arith.cmpi slt, %0, %343 : vector<3x128xi32>
    %345 = arith.select %344, %341, %342 : vector<3x128xi1>, vector<3x128xf32>
    %c20 = arith.constant 20 : index
    %346 = memref.load %arg2[%c20] : memref<108xf32, #tpu.memory_space<smem>>
    %347 = vector.broadcast %346 : f32 to vector<3x128xf32>
    %348 = arith.mulf %347, %345 : vector<3x128xf32>
    %349 = arith.addf %332, %348 : vector<3x128xf32>
    %c56 = arith.constant 56 : index
    %350 = memref.load %arg2[%c56] : memref<108xf32, #tpu.memory_space<smem>>
    %351 = vector.broadcast %350 : f32 to vector<3x128xf32>
    %352 = arith.mulf %351, %345 : vector<3x128xf32>
    %353 = arith.addf %336, %352 : vector<3x128xf32>
    %c92 = arith.constant 92 : index
    %354 = memref.load %arg2[%c92] : memref<108xf32, #tpu.memory_space<smem>>
    %355 = vector.broadcast %354 : f32 to vector<3x128xf32>
    %356 = arith.mulf %355, %345 : vector<3x128xf32>
    %357 = arith.addf %340, %356 : vector<3x128xf32>
    %c110_i32_60 = arith.constant 110 : i32
    %358 = tpu.dynamic_rotate %310 by %c110_i32_60 dim 1 : vector<3x128xf32>, i32 -> vector<3x128xf32>
    %c110_i32_61 = arith.constant 110 : i32
    %359 = tpu.dynamic_rotate %323 by %c110_i32_61 dim 1 : vector<3x128xf32>, i32 -> vector<3x128xf32>
    %c110_i32_62 = arith.constant 110 : i32
    %360 = vector.broadcast %c110_i32_62 : i32 to vector<3x128xi32>
    %361 = arith.cmpi slt, %0, %360 : vector<3x128xi32>
    %362 = arith.select %361, %358, %359 : vector<3x128xi1>, vector<3x128xf32>
    %c21 = arith.constant 21 : index
    %363 = memref.load %arg2[%c21] : memref<108xf32, #tpu.memory_space<smem>>
    %364 = vector.broadcast %363 : f32 to vector<3x128xf32>
    %365 = arith.mulf %364, %362 : vector<3x128xf32>
    %366 = arith.addf %349, %365 : vector<3x128xf32>
    %c57 = arith.constant 57 : index
    %367 = memref.load %arg2[%c57] : memref<108xf32, #tpu.memory_space<smem>>
    %368 = vector.broadcast %367 : f32 to vector<3x128xf32>
    %369 = arith.mulf %368, %362 : vector<3x128xf32>
    %370 = arith.addf %353, %369 : vector<3x128xf32>
    %c93 = arith.constant 93 : index
    %371 = memref.load %arg2[%c93] : memref<108xf32, #tpu.memory_space<smem>>
    %372 = vector.broadcast %371 : f32 to vector<3x128xf32>
    %373 = arith.mulf %372, %362 : vector<3x128xf32>
    %374 = arith.addf %357, %373 : vector<3x128xf32>
    %c109_i32_63 = arith.constant 109 : i32
    %375 = tpu.dynamic_rotate %310 by %c109_i32_63 dim 1 : vector<3x128xf32>, i32 -> vector<3x128xf32>
    %c109_i32_64 = arith.constant 109 : i32
    %376 = tpu.dynamic_rotate %323 by %c109_i32_64 dim 1 : vector<3x128xf32>, i32 -> vector<3x128xf32>
    %c109_i32_65 = arith.constant 109 : i32
    %377 = vector.broadcast %c109_i32_65 : i32 to vector<3x128xi32>
    %378 = arith.cmpi slt, %0, %377 : vector<3x128xi32>
    %379 = arith.select %378, %375, %376 : vector<3x128xi1>, vector<3x128xf32>
    %c22 = arith.constant 22 : index
    %380 = memref.load %arg2[%c22] : memref<108xf32, #tpu.memory_space<smem>>
    %381 = vector.broadcast %380 : f32 to vector<3x128xf32>
    %382 = arith.mulf %381, %379 : vector<3x128xf32>
    %383 = arith.addf %366, %382 : vector<3x128xf32>
    %c58 = arith.constant 58 : index
    %384 = memref.load %arg2[%c58] : memref<108xf32, #tpu.memory_space<smem>>
    %385 = vector.broadcast %384 : f32 to vector<3x128xf32>
    %386 = arith.mulf %385, %379 : vector<3x128xf32>
    %387 = arith.addf %370, %386 : vector<3x128xf32>
    %c94 = arith.constant 94 : index
    %388 = memref.load %arg2[%c94] : memref<108xf32, #tpu.memory_space<smem>>
    %389 = vector.broadcast %388 : f32 to vector<3x128xf32>
    %390 = arith.mulf %389, %379 : vector<3x128xf32>
    %391 = arith.addf %374, %390 : vector<3x128xf32>
    %c108_i32_66 = arith.constant 108 : i32
    %392 = tpu.dynamic_rotate %310 by %c108_i32_66 dim 1 : vector<3x128xf32>, i32 -> vector<3x128xf32>
    %c108_i32_67 = arith.constant 108 : i32
    %393 = tpu.dynamic_rotate %323 by %c108_i32_67 dim 1 : vector<3x128xf32>, i32 -> vector<3x128xf32>
    %c108_i32_68 = arith.constant 108 : i32
    %394 = vector.broadcast %c108_i32_68 : i32 to vector<3x128xi32>
    %395 = arith.cmpi slt, %0, %394 : vector<3x128xi32>
    %396 = arith.select %395, %392, %393 : vector<3x128xi1>, vector<3x128xf32>
    %c23 = arith.constant 23 : index
    %397 = memref.load %arg2[%c23] : memref<108xf32, #tpu.memory_space<smem>>
    %398 = vector.broadcast %397 : f32 to vector<3x128xf32>
    %399 = arith.mulf %398, %396 : vector<3x128xf32>
    %400 = arith.addf %383, %399 : vector<3x128xf32>
    %c59 = arith.constant 59 : index
    %401 = memref.load %arg2[%c59] : memref<108xf32, #tpu.memory_space<smem>>
    %402 = vector.broadcast %401 : f32 to vector<3x128xf32>
    %403 = arith.mulf %402, %396 : vector<3x128xf32>
    %404 = arith.addf %387, %403 : vector<3x128xf32>
    %c95 = arith.constant 95 : index
    %405 = memref.load %arg2[%c95] : memref<108xf32, #tpu.memory_space<smem>>
    %406 = vector.broadcast %405 : f32 to vector<3x128xf32>
    %407 = arith.mulf %406, %396 : vector<3x128xf32>
    %408 = arith.addf %391, %407 : vector<3x128xf32>
    %c92_i32_69 = arith.constant 92 : i32
    %409 = tpu.dynamic_rotate %310 by %c92_i32_69 dim 1 : vector<3x128xf32>, i32 -> vector<3x128xf32>
    %c92_i32_70 = arith.constant 92 : i32
    %410 = tpu.dynamic_rotate %323 by %c92_i32_70 dim 1 : vector<3x128xf32>, i32 -> vector<3x128xf32>
    %c92_i32_71 = arith.constant 92 : i32
    %411 = vector.broadcast %c92_i32_71 : i32 to vector<3x128xi32>
    %412 = arith.cmpi slt, %0, %411 : vector<3x128xi32>
    %413 = arith.select %412, %409, %410 : vector<3x128xi1>, vector<3x128xf32>
    %c24 = arith.constant 24 : index
    %414 = memref.load %arg2[%c24] : memref<108xf32, #tpu.memory_space<smem>>
    %415 = vector.broadcast %414 : f32 to vector<3x128xf32>
    %416 = arith.mulf %415, %413 : vector<3x128xf32>
    %417 = arith.addf %400, %416 : vector<3x128xf32>
    %c60 = arith.constant 60 : index
    %418 = memref.load %arg2[%c60] : memref<108xf32, #tpu.memory_space<smem>>
    %419 = vector.broadcast %418 : f32 to vector<3x128xf32>
    %420 = arith.mulf %419, %413 : vector<3x128xf32>
    %421 = arith.addf %404, %420 : vector<3x128xf32>
    %c96 = arith.constant 96 : index
    %422 = memref.load %arg2[%c96] : memref<108xf32, #tpu.memory_space<smem>>
    %423 = vector.broadcast %422 : f32 to vector<3x128xf32>
    %424 = arith.mulf %423, %413 : vector<3x128xf32>
    %425 = arith.addf %408, %424 : vector<3x128xf32>
    %c91_i32_72 = arith.constant 91 : i32
    %426 = tpu.dynamic_rotate %310 by %c91_i32_72 dim 1 : vector<3x128xf32>, i32 -> vector<3x128xf32>
    %c91_i32_73 = arith.constant 91 : i32
    %427 = tpu.dynamic_rotate %323 by %c91_i32_73 dim 1 : vector<3x128xf32>, i32 -> vector<3x128xf32>
    %c91_i32_74 = arith.constant 91 : i32
    %428 = vector.broadcast %c91_i32_74 : i32 to vector<3x128xi32>
    %429 = arith.cmpi slt, %0, %428 : vector<3x128xi32>
    %430 = arith.select %429, %426, %427 : vector<3x128xi1>, vector<3x128xf32>
    %c25 = arith.constant 25 : index
    %431 = memref.load %arg2[%c25] : memref<108xf32, #tpu.memory_space<smem>>
    %432 = vector.broadcast %431 : f32 to vector<3x128xf32>
    %433 = arith.mulf %432, %430 : vector<3x128xf32>
    %434 = arith.addf %417, %433 : vector<3x128xf32>
    %c61 = arith.constant 61 : index
    %435 = memref.load %arg2[%c61] : memref<108xf32, #tpu.memory_space<smem>>
    %436 = vector.broadcast %435 : f32 to vector<3x128xf32>
    %437 = arith.mulf %436, %430 : vector<3x128xf32>
    %438 = arith.addf %421, %437 : vector<3x128xf32>
    %c97 = arith.constant 97 : index
    %439 = memref.load %arg2[%c97] : memref<108xf32, #tpu.memory_space<smem>>
    %440 = vector.broadcast %439 : f32 to vector<3x128xf32>
    %441 = arith.mulf %440, %430 : vector<3x128xf32>
    %442 = arith.addf %425, %441 : vector<3x128xf32>
    %c90_i32_75 = arith.constant 90 : i32
    %443 = tpu.dynamic_rotate %310 by %c90_i32_75 dim 1 : vector<3x128xf32>, i32 -> vector<3x128xf32>
    %c90_i32_76 = arith.constant 90 : i32
    %444 = tpu.dynamic_rotate %323 by %c90_i32_76 dim 1 : vector<3x128xf32>, i32 -> vector<3x128xf32>
    %c90_i32_77 = arith.constant 90 : i32
    %445 = vector.broadcast %c90_i32_77 : i32 to vector<3x128xi32>
    %446 = arith.cmpi slt, %0, %445 : vector<3x128xi32>
    %447 = arith.select %446, %443, %444 : vector<3x128xi1>, vector<3x128xf32>
    %c26 = arith.constant 26 : index
    %448 = memref.load %arg2[%c26] : memref<108xf32, #tpu.memory_space<smem>>
    %449 = vector.broadcast %448 : f32 to vector<3x128xf32>
    %450 = arith.mulf %449, %447 : vector<3x128xf32>
    %451 = arith.addf %434, %450 : vector<3x128xf32>
    %c62 = arith.constant 62 : index
    %452 = memref.load %arg2[%c62] : memref<108xf32, #tpu.memory_space<smem>>
    %453 = vector.broadcast %452 : f32 to vector<3x128xf32>
    %454 = arith.mulf %453, %447 : vector<3x128xf32>
    %455 = arith.addf %438, %454 : vector<3x128xf32>
    %c98 = arith.constant 98 : index
    %456 = memref.load %arg2[%c98] : memref<108xf32, #tpu.memory_space<smem>>
    %457 = vector.broadcast %456 : f32 to vector<3x128xf32>
    %458 = arith.mulf %457, %447 : vector<3x128xf32>
    %459 = arith.addf %442, %458 : vector<3x128xf32>
    %c0_78 = arith.constant 0 : index
    %c3_79 = arith.constant 3 : index
    %c0_80 = arith.constant 0 : index
    %c0_81 = arith.constant 0 : index
    %460 = vector.load %arg1[%c0_78, %c3_79, %c0_80, %c0_81] : memref<1x4x5x128xf32, #tpu.memory_space<vmem>>, vector<1x1x5x128xf32>
    %461 = vector.shape_cast %460 : vector<1x1x5x128xf32> to vector<5x128xf32>
    %462 = vector.extract_strided_slice %461 {offsets = [0, 0], sizes = [3, 128], strides = [1, 1]} : vector<5x128xf32> to vector<3x128xf32>
    %c27 = arith.constant 27 : index
    %463 = memref.load %arg2[%c27] : memref<108xf32, #tpu.memory_space<smem>>
    %464 = vector.broadcast %463 : f32 to vector<3x128xf32>
    %465 = arith.mulf %464, %462 : vector<3x128xf32>
    %466 = arith.addf %451, %465 : vector<3x128xf32>
    %c63 = arith.constant 63 : index
    %467 = memref.load %arg2[%c63] : memref<108xf32, #tpu.memory_space<smem>>
    %468 = vector.broadcast %467 : f32 to vector<3x128xf32>
    %469 = arith.mulf %468, %462 : vector<3x128xf32>
    %470 = arith.addf %455, %469 : vector<3x128xf32>
    %c99 = arith.constant 99 : index
    %471 = memref.load %arg2[%c99] : memref<108xf32, #tpu.memory_space<smem>>
    %472 = vector.broadcast %471 : f32 to vector<3x128xf32>
    %473 = arith.mulf %472, %462 : vector<3x128xf32>
    %474 = arith.addf %459, %473 : vector<3x128xf32>
    %475 = vector.extract_strided_slice %461 {offsets = [1, 0], sizes = [3, 128], strides = [1, 1]} : vector<5x128xf32> to vector<3x128xf32>
    %c127_i32_82 = arith.constant 127 : i32
    %476 = tpu.dynamic_rotate %462 by %c127_i32_82 dim 1 : vector<3x128xf32>, i32 -> vector<3x128xf32>
    %c127_i32_83 = arith.constant 127 : i32
    %477 = tpu.dynamic_rotate %475 by %c127_i32_83 dim 1 : vector<3x128xf32>, i32 -> vector<3x128xf32>
    %c127_i32_84 = arith.constant 127 : i32
    %478 = vector.broadcast %c127_i32_84 : i32 to vector<3x128xi32>
    %479 = arith.cmpi slt, %0, %478 : vector<3x128xi32>
    %480 = arith.select %479, %476, %477 : vector<3x128xi1>, vector<3x128xf32>
    %c28 = arith.constant 28 : index
    %481 = memref.load %arg2[%c28] : memref<108xf32, #tpu.memory_space<smem>>
    %482 = vector.broadcast %481 : f32 to vector<3x128xf32>
    %483 = arith.mulf %482, %480 : vector<3x128xf32>
    %484 = arith.addf %466, %483 : vector<3x128xf32>
    %c64 = arith.constant 64 : index
    %485 = memref.load %arg2[%c64] : memref<108xf32, #tpu.memory_space<smem>>
    %486 = vector.broadcast %485 : f32 to vector<3x128xf32>
    %487 = arith.mulf %486, %480 : vector<3x128xf32>
    %488 = arith.addf %470, %487 : vector<3x128xf32>
    %c100 = arith.constant 100 : index
    %489 = memref.load %arg2[%c100] : memref<108xf32, #tpu.memory_space<smem>>
    %490 = vector.broadcast %489 : f32 to vector<3x128xf32>
    %491 = arith.mulf %490, %480 : vector<3x128xf32>
    %492 = arith.addf %474, %491 : vector<3x128xf32>
    %c126_i32_85 = arith.constant 126 : i32
    %493 = tpu.dynamic_rotate %462 by %c126_i32_85 dim 1 : vector<3x128xf32>, i32 -> vector<3x128xf32>
    %c126_i32_86 = arith.constant 126 : i32
    %494 = tpu.dynamic_rotate %475 by %c126_i32_86 dim 1 : vector<3x128xf32>, i32 -> vector<3x128xf32>
    %c126_i32_87 = arith.constant 126 : i32
    %495 = vector.broadcast %c126_i32_87 : i32 to vector<3x128xi32>
    %496 = arith.cmpi slt, %0, %495 : vector<3x128xi32>
    %497 = arith.select %496, %493, %494 : vector<3x128xi1>, vector<3x128xf32>
    %c29 = arith.constant 29 : index
    %498 = memref.load %arg2[%c29] : memref<108xf32, #tpu.memory_space<smem>>
    %499 = vector.broadcast %498 : f32 to vector<3x128xf32>
    %500 = arith.mulf %499, %497 : vector<3x128xf32>
    %501 = arith.addf %484, %500 : vector<3x128xf32>
    %c65 = arith.constant 65 : index
    %502 = memref.load %arg2[%c65] : memref<108xf32, #tpu.memory_space<smem>>
    %503 = vector.broadcast %502 : f32 to vector<3x128xf32>
    %504 = arith.mulf %503, %497 : vector<3x128xf32>
    %505 = arith.addf %488, %504 : vector<3x128xf32>
    %c101 = arith.constant 101 : index
    %506 = memref.load %arg2[%c101] : memref<108xf32, #tpu.memory_space<smem>>
    %507 = vector.broadcast %506 : f32 to vector<3x128xf32>
    %508 = arith.mulf %507, %497 : vector<3x128xf32>
    %509 = arith.addf %492, %508 : vector<3x128xf32>
    %c110_i32_88 = arith.constant 110 : i32
    %510 = tpu.dynamic_rotate %462 by %c110_i32_88 dim 1 : vector<3x128xf32>, i32 -> vector<3x128xf32>
    %c110_i32_89 = arith.constant 110 : i32
    %511 = tpu.dynamic_rotate %475 by %c110_i32_89 dim 1 : vector<3x128xf32>, i32 -> vector<3x128xf32>
    %c110_i32_90 = arith.constant 110 : i32
    %512 = vector.broadcast %c110_i32_90 : i32 to vector<3x128xi32>
    %513 = arith.cmpi slt, %0, %512 : vector<3x128xi32>
    %514 = arith.select %513, %510, %511 : vector<3x128xi1>, vector<3x128xf32>
    %c30 = arith.constant 30 : index
    %515 = memref.load %arg2[%c30] : memref<108xf32, #tpu.memory_space<smem>>
    %516 = vector.broadcast %515 : f32 to vector<3x128xf32>
    %517 = arith.mulf %516, %514 : vector<3x128xf32>
    %518 = arith.addf %501, %517 : vector<3x128xf32>
    %c66 = arith.constant 66 : index
    %519 = memref.load %arg2[%c66] : memref<108xf32, #tpu.memory_space<smem>>
    %520 = vector.broadcast %519 : f32 to vector<3x128xf32>
    %521 = arith.mulf %520, %514 : vector<3x128xf32>
    %522 = arith.addf %505, %521 : vector<3x128xf32>
    %c102 = arith.constant 102 : index
    %523 = memref.load %arg2[%c102] : memref<108xf32, #tpu.memory_space<smem>>
    %524 = vector.broadcast %523 : f32 to vector<3x128xf32>
    %525 = arith.mulf %524, %514 : vector<3x128xf32>
    %526 = arith.addf %509, %525 : vector<3x128xf32>
    %c109_i32_91 = arith.constant 109 : i32
    %527 = tpu.dynamic_rotate %462 by %c109_i32_91 dim 1 : vector<3x128xf32>, i32 -> vector<3x128xf32>
    %c109_i32_92 = arith.constant 109 : i32
    %528 = tpu.dynamic_rotate %475 by %c109_i32_92 dim 1 : vector<3x128xf32>, i32 -> vector<3x128xf32>
    %c109_i32_93 = arith.constant 109 : i32
    %529 = vector.broadcast %c109_i32_93 : i32 to vector<3x128xi32>
    %530 = arith.cmpi slt, %0, %529 : vector<3x128xi32>
    %531 = arith.select %530, %527, %528 : vector<3x128xi1>, vector<3x128xf32>
    %c31 = arith.constant 31 : index
    %532 = memref.load %arg2[%c31] : memref<108xf32, #tpu.memory_space<smem>>
    %533 = vector.broadcast %532 : f32 to vector<3x128xf32>
    %534 = arith.mulf %533, %531 : vector<3x128xf32>
    %535 = arith.addf %518, %534 : vector<3x128xf32>
    %c67 = arith.constant 67 : index
    %536 = memref.load %arg2[%c67] : memref<108xf32, #tpu.memory_space<smem>>
    %537 = vector.broadcast %536 : f32 to vector<3x128xf32>
    %538 = arith.mulf %537, %531 : vector<3x128xf32>
    %539 = arith.addf %522, %538 : vector<3x128xf32>
    %c103 = arith.constant 103 : index
    %540 = memref.load %arg2[%c103] : memref<108xf32, #tpu.memory_space<smem>>
    %541 = vector.broadcast %540 : f32 to vector<3x128xf32>
    %542 = arith.mulf %541, %531 : vector<3x128xf32>
    %543 = arith.addf %526, %542 : vector<3x128xf32>
    %c108_i32_94 = arith.constant 108 : i32
    %544 = tpu.dynamic_rotate %462 by %c108_i32_94 dim 1 : vector<3x128xf32>, i32 -> vector<3x128xf32>
    %c108_i32_95 = arith.constant 108 : i32
    %545 = tpu.dynamic_rotate %475 by %c108_i32_95 dim 1 : vector<3x128xf32>, i32 -> vector<3x128xf32>
    %c108_i32_96 = arith.constant 108 : i32
    %546 = vector.broadcast %c108_i32_96 : i32 to vector<3x128xi32>
    %547 = arith.cmpi slt, %0, %546 : vector<3x128xi32>
    %548 = arith.select %547, %544, %545 : vector<3x128xi1>, vector<3x128xf32>
    %c32 = arith.constant 32 : index
    %549 = memref.load %arg2[%c32] : memref<108xf32, #tpu.memory_space<smem>>
    %550 = vector.broadcast %549 : f32 to vector<3x128xf32>
    %551 = arith.mulf %550, %548 : vector<3x128xf32>
    %552 = arith.addf %535, %551 : vector<3x128xf32>
    %c68 = arith.constant 68 : index
    %553 = memref.load %arg2[%c68] : memref<108xf32, #tpu.memory_space<smem>>
    %554 = vector.broadcast %553 : f32 to vector<3x128xf32>
    %555 = arith.mulf %554, %548 : vector<3x128xf32>
    %556 = arith.addf %539, %555 : vector<3x128xf32>
    %c104 = arith.constant 104 : index
    %557 = memref.load %arg2[%c104] : memref<108xf32, #tpu.memory_space<smem>>
    %558 = vector.broadcast %557 : f32 to vector<3x128xf32>
    %559 = arith.mulf %558, %548 : vector<3x128xf32>
    %560 = arith.addf %543, %559 : vector<3x128xf32>
    %c92_i32_97 = arith.constant 92 : i32
    %561 = tpu.dynamic_rotate %462 by %c92_i32_97 dim 1 : vector<3x128xf32>, i32 -> vector<3x128xf32>
    %c92_i32_98 = arith.constant 92 : i32
    %562 = tpu.dynamic_rotate %475 by %c92_i32_98 dim 1 : vector<3x128xf32>, i32 -> vector<3x128xf32>
    %c92_i32_99 = arith.constant 92 : i32
    %563 = vector.broadcast %c92_i32_99 : i32 to vector<3x128xi32>
    %564 = arith.cmpi slt, %0, %563 : vector<3x128xi32>
    %565 = arith.select %564, %561, %562 : vector<3x128xi1>, vector<3x128xf32>
    %c33 = arith.constant 33 : index
    %566 = memref.load %arg2[%c33] : memref<108xf32, #tpu.memory_space<smem>>
    %567 = vector.broadcast %566 : f32 to vector<3x128xf32>
    %568 = arith.mulf %567, %565 : vector<3x128xf32>
    %569 = arith.addf %552, %568 : vector<3x128xf32>
    %c69 = arith.constant 69 : index
    %570 = memref.load %arg2[%c69] : memref<108xf32, #tpu.memory_space<smem>>
    %571 = vector.broadcast %570 : f32 to vector<3x128xf32>
    %572 = arith.mulf %571, %565 : vector<3x128xf32>
    %573 = arith.addf %556, %572 : vector<3x128xf32>
    %c105 = arith.constant 105 : index
    %574 = memref.load %arg2[%c105] : memref<108xf32, #tpu.memory_space<smem>>
    %575 = vector.broadcast %574 : f32 to vector<3x128xf32>
    %576 = arith.mulf %575, %565 : vector<3x128xf32>
    %577 = arith.addf %560, %576 : vector<3x128xf32>
    %c91_i32_100 = arith.constant 91 : i32
    %578 = tpu.dynamic_rotate %462 by %c91_i32_100 dim 1 : vector<3x128xf32>, i32 -> vector<3x128xf32>
    %c91_i32_101 = arith.constant 91 : i32
    %579 = tpu.dynamic_rotate %475 by %c91_i32_101 dim 1 : vector<3x128xf32>, i32 -> vector<3x128xf32>
    %c91_i32_102 = arith.constant 91 : i32
    %580 = vector.broadcast %c91_i32_102 : i32 to vector<3x128xi32>
    %581 = arith.cmpi slt, %0, %580 : vector<3x128xi32>
    %582 = arith.select %581, %578, %579 : vector<3x128xi1>, vector<3x128xf32>
    %c34 = arith.constant 34 : index
    %583 = memref.load %arg2[%c34] : memref<108xf32, #tpu.memory_space<smem>>
    %584 = vector.broadcast %583 : f32 to vector<3x128xf32>
    %585 = arith.mulf %584, %582 : vector<3x128xf32>
    %586 = arith.addf %569, %585 : vector<3x128xf32>
    %c70 = arith.constant 70 : index
    %587 = memref.load %arg2[%c70] : memref<108xf32, #tpu.memory_space<smem>>
    %588 = vector.broadcast %587 : f32 to vector<3x128xf32>
    %589 = arith.mulf %588, %582 : vector<3x128xf32>
    %590 = arith.addf %573, %589 : vector<3x128xf32>
    %c106 = arith.constant 106 : index
    %591 = memref.load %arg2[%c106] : memref<108xf32, #tpu.memory_space<smem>>
    %592 = vector.broadcast %591 : f32 to vector<3x128xf32>
    %593 = arith.mulf %592, %582 : vector<3x128xf32>
    %594 = arith.addf %577, %593 : vector<3x128xf32>
    %c90_i32_103 = arith.constant 90 : i32
    %595 = tpu.dynamic_rotate %462 by %c90_i32_103 dim 1 : vector<3x128xf32>, i32 -> vector<3x128xf32>
    %c90_i32_104 = arith.constant 90 : i32
    %596 = tpu.dynamic_rotate %475 by %c90_i32_104 dim 1 : vector<3x128xf32>, i32 -> vector<3x128xf32>
    %c90_i32_105 = arith.constant 90 : i32
    %597 = vector.broadcast %c90_i32_105 : i32 to vector<3x128xi32>
    %598 = arith.cmpi slt, %0, %597 : vector<3x128xi32>
    %599 = arith.select %598, %595, %596 : vector<3x128xi1>, vector<3x128xf32>
    %c35 = arith.constant 35 : index
    %600 = memref.load %arg2[%c35] : memref<108xf32, #tpu.memory_space<smem>>
    %601 = vector.broadcast %600 : f32 to vector<3x128xf32>
    %602 = arith.mulf %601, %599 : vector<3x128xf32>
    %603 = arith.addf %586, %602 : vector<3x128xf32>
    %c71 = arith.constant 71 : index
    %604 = memref.load %arg2[%c71] : memref<108xf32, #tpu.memory_space<smem>>
    %605 = vector.broadcast %604 : f32 to vector<3x128xf32>
    %606 = arith.mulf %605, %599 : vector<3x128xf32>
    %607 = arith.addf %590, %606 : vector<3x128xf32>
    %c107 = arith.constant 107 : index
    %608 = memref.load %arg2[%c107] : memref<108xf32, #tpu.memory_space<smem>>
    %609 = vector.broadcast %608 : f32 to vector<3x128xf32>
    %610 = arith.mulf %609, %599 : vector<3x128xf32>
    %611 = arith.addf %594, %610 : vector<3x128xf32>
    %612 = math.tanh %603 : vector<3x128xf32>
    %c0_106 = arith.constant 0 : index
    %c0_107 = arith.constant 0 : index
    %c0_108 = arith.constant 0 : index
    %c0_109 = arith.constant 0 : index
    %613 = vector.load %arg3[%c0_106, %c0_107, %c0_108, %c0_109] : memref<1x3x3x128xf32, #tpu.memory_space<vmem>>, vector<1x1x3x128xf32>
    %614 = vector.shape_cast %613 : vector<1x1x3x128xf32> to vector<3x128xf32>
    %615 = vector.shape_cast %612 : vector<3x128xf32> to vector<1x1x3x128xf32>
    tpu.vector_store %arg3[%c0_106, %c0_107, %c0_108, %c0_109], %615 {strides = array<i32>} : memref<1x3x3x128xf32, #tpu.memory_space<vmem>>, vector<1x1x3x128xf32>,
    %616 = math.tanh %607 : vector<3x128xf32>
    %c0_110 = arith.constant 0 : index
    %c1_111 = arith.constant 1 : index
    %c0_112 = arith.constant 0 : index
    %c0_113 = arith.constant 0 : index
    %617 = vector.load %arg3[%c0_110, %c1_111, %c0_112, %c0_113] : memref<1x3x3x128xf32, #tpu.memory_space<vmem>>, vector<1x1x3x128xf32>
    %618 = vector.shape_cast %617 : vector<1x1x3x128xf32> to vector<3x128xf32>
    %619 = vector.shape_cast %616 : vector<3x128xf32> to vector<1x1x3x128xf32>
    tpu.vector_store %arg3[%c0_110, %c1_111, %c0_112, %c0_113], %619 {strides = array<i32>} : memref<1x3x3x128xf32, #tpu.memory_space<vmem>>, vector<1x1x3x128xf32>,
    %620 = math.tanh %611 : vector<3x128xf32>
    %c0_114 = arith.constant 0 : index
    %c2_115 = arith.constant 2 : index
    %c0_116 = arith.constant 0 : index
    %c0_117 = arith.constant 0 : index
    %621 = vector.load %arg3[%c0_114, %c2_115, %c0_116, %c0_117] : memref<1x3x3x128xf32, #tpu.memory_space<vmem>>, vector<1x1x3x128xf32>
    %622 = vector.shape_cast %621 : vector<1x1x3x128xf32> to vector<3x128xf32>
    %623 = vector.shape_cast %620 : vector<3x128xf32> to vector<1x1x3x128xf32>
    tpu.vector_store %arg3[%c0_114, %c2_115, %c0_116, %c0_117], %623 {strides = array<i32>} : memref<1x3x3x128xf32, #tpu.memory_space<vmem>>, vector<1x1x3x128xf32>,
    return
  }
  func.func @transform_0(%arg0: i32) -> (i32, i32, i32, i32) {
    %c0_i32 = arith.constant 0 : i32
    %c0_i32_0 = arith.constant 0 : i32
    %c0_i32_1 = arith.constant 0 : i32
    %c0_i32_2 = arith.constant 0 : i32
    return %arg0, %c0_i32, %c0_i32_0, %c0_i32_1 : i32, i32, i32, i32
  }
  func.func @transform_1(%arg0: i32) -> i32 {
    %c0_i32 = arith.constant 0 : i32
    %c0_i32_0 = arith.constant 0 : i32
    return %c0_i32 : i32
  }
  func.func @transform_2(%arg0: i32) -> (i32, i32, i32, i32) {
    %c0_i32 = arith.constant 0 : i32
    %c0_i32_0 = arith.constant 0 : i32
    %c0_i32_1 = arith.constant 0 : i32
    %c0_i32_2 = arith.constant 0 : i32
    return %arg0, %c0_i32, %c0_i32_0, %c0_i32_1 : i32, i32, i32, i32
  }
}

</mosaic_0001>

<llo_original>
// kernel: tpu_custom_call.1
$region0: #{tpu_custom_call.1}
  #allocation0 [shape = 'u32[]', space=smem, size = 0x4, offset = 0x4, fixed_abs, tag = 'smem constant byte address 0x4 - core index']
  #allocation1 [shape = 'u32[72,128]{1,0:T(1,128)}', space=vmem, size = 0x9000, scoped, tag = 'internal scratch']
  %s0 = inlined_call_operand.vmem [shape: f32[2,4,5,128], index: 0, kind: input, shape index: {}]
  %s1 = inlined_call_operand.vmem [shape: f32[108], index: 1, kind: input, shape index: {}]
  %s2 = inlined_call_operand.vmem [shape: f32[2,3,3,128], index: 2, kind: output, shape index: {}]
  %s3 = sld [smem:[#allocation0]]
  $region45: #{tpu_custom_call.1} parent=0
    _
  %s5 = ssub.s32 1, %s3
  %s6 = scalar_select 0, %s5, %s3
  $region1: #{tpu_custom_call.1} parent=0
    #allocation2 [shape = 'u8[512]{0}', space=smem, size = 0x200, scoped, tag = 'input window, operand 1, single buffered']
    #allocation3 [shape = 's32[2]{0}', space=sflag, size = 0x8, scoped, tag = 'scoped memory for tpu_custom_call.1']
    %7 = vsyncpa [#allocation3], 0
    loop: start=0, step=1, limit=4
    $region2: #{tpu_custom_call.1} parent=1 // loop_pre_header
      _
    $region3: #{tpu_custom_call.1} parent=1 // loop_header
      %s9 = sphi 0, %s13
      %p10 = scmp.ge.s32.totalorder %s9, 4
      %s19 = sphi 0, %s21
      %s22 = sphi 0, %s19
      %s23 = sphi 0, %s22
      %s39 = sphi 0, %s23
      %s43 = sphi 0, %s43
      %s45 = sphi 0, %s43
      %s46 = sphi 0, %s45
      %s60 = sphi 0, %s46
      %s66 = sphi 0, %s68
      %s69 = sphi 0, %s66
      %s70 = sphi 0, %s69
      %s86 = sphi 0, %s70
    $region4: #{tpu_custom_call.1} parent=1 // loop_header_branch
      %12 = sbr.rel (%p10) target = $region8
    $region5: #{tpu_custom_call.1} parent=1 // loop_body
      %s14 = ssub.s32 %s9, 1
      %s15 = ssub.s32 %s9, 2
      %s16 = sadd.s32 %s9, 1
      %s17 = ssub.s32 %s9, %s16
      %p18 = scmp.eq.s32.totalorder %s17, 0
      %s20 = sadd.s32 %s19, 1
      %s21 = scalar_select %p18, %s19, %s20
      %p24 = pneg %p18
      %p25 = scmp.eq.s32.totalorder %s9, 1
      %p26 = por %p24, %p25
      %p27 = scmp.ne.s32.totalorder %s19, %s22
      %p28 = scmp.eq.s32.totalorder %s9, 0
      %p29 = por %p27, %p28
      %p30 = scmp.ne.s32.totalorder %s19, %s22
      %p31 = scmp.eq.s32.totalorder %s14, 1
      %p32 = por %p30, %p31
      %p33 = scmp.ne.s32.totalorder %s22, %s23
      %p34 = scmp.eq.s32.totalorder %s14, 0
      %p35 = por %p33, %p34
      %p36 = scmp.ne.s32.totalorder %s22, %s23
      %p37 = scmp.eq.s32.totalorder %s15, 1
      %p38 = por %p36, %p37
      %p40 = scmp.ne.s32.totalorder %s23, %s39
      %p41 = scmp.eq.s32.totalorder %s15, 0
      %p42 = por %p40, %p41
      %s44 = sadd.s32 %s43, 1
      %p47 = scmp.eq.s32.totalorder %s9, 1
      %p48 = scmp.ne.s32.totalorder %s43, %s45
      %p49 = scmp.eq.s32.totalorder %s9, 0
      %p50 = por %p48, %p49
      %p51 = scmp.ne.s32.totalorder %s43, %s45
      %p52 = scmp.eq.s32.totalorder %s14, 1
      %p53 = por %p51, %p52
      %p54 = scmp.ne.s32.totalorder %s45, %s46
      %p55 = scmp.eq.s32.totalorder %s14, 0
      %p56 = por %p54, %p55
      %p57 = scmp.ne.s32.totalorder %s45, %s46
      %p58 = scmp.eq.s32.totalorder %s15, 1
      %p59 = por %p57, %p58
      %p61 = scmp.ne.s32.totalorder %s46, %s60
      %p62 = scmp.eq.s32.totalorder %s15, 0
      %p63 = por %p61, %p62
      %s64 = ssub.s32 %s9, %s16
      %p65 = scmp.eq.s32.totalorder %s64, 0
      %s67 = sadd.s32 %s66, 1
      %s68 = scalar_select %p65, %s66, %s67
      %p71 = pneg %p65
      %p72 = scmp.eq.s32.totalorder %s9, 1
      %p73 = por %p71, %p72
      %p74 = scmp.ne.s32.totalorder %s66, %s69
      %p75 = scmp.eq.s32.totalorder %s9, 0
      %p76 = por %p74, %p75
      %p77 = scmp.ne.s32.totalorder %s66, %s69
      %p78 = scmp.eq.s32.totalorder %s14, 1
      %p79 = por %p77, %p78
      %p80 = scmp.ne.s32.totalorder %s69, %s70
      %p81 = scmp.eq.s32.totalorder %s14, 0
      %p82 = por %p80, %p81
      %p83 = scmp.ne.s32.totalorder %s69, %s70
      %p84 = scmp.eq.s32.totalorder %s15, 1
      %p85 = por %p83, %p84
      %p87 = scmp.ne.s32.totalorder %s70, %s86
      %p88 = scmp.eq.s32.totalorder %s15, 0
      %p89 = por %p87, %p88
      %p90 = scmp.le.s32.totalorder 1, %s9
      %p91 = scmp.lt.s32.totalorder %s9, 3
      %p92 = pnand %p90, %p91
      %p93 = pneg %p92
      // Predicated region
      $region9: #{tpu_custom_call.1} parent=5 // pred_check
        _
      $region10: #{tpu_custom_call.1} parent=5 // pred_check_branch
        %95 = sbr.rel (%p92) target = $region12
      $region11: #{tpu_custom_call.1} parent=5 // pred_region
        %s96 = ssub.s32 %s9, 1
        // Predicated region
        $region13: #{tpu_custom_call.1} parent=11 // pred_check
          %p97 = pneg %p56
        $region14: #{tpu_custom_call.1} parent=11 // pred_check_branch
          %99 = sbr.rel (%p97) target = $region16
        $region15: #{tpu_custom_call.1} parent=11 // pred_region
          %101 = vsyncadd [#allocation3], 0
          %s103 = sshll.u32 %s1, 4
          %s104 = int_to_ptr.vmem [resolvable:$true] %s103
          %106 = dma.vmem_to_smem %s104, 16, [#allocation2], [#allocation3]
        $region16: #{tpu_custom_call.1} parent=11 // pred_fallthru
          _
      $region12: #{tpu_custom_call.1} parent=5 // pred_fallthru
        _
      %p107 = scmp.lt.s32.totalorder %s9, 2
      // Predicated region
      $region17: #{tpu_custom_call.1} parent=5 // pred_check
        %p108 = pneg %p107
      $region18: #{tpu_custom_call.1} parent=5 // pred_check_branch
        %110 = sbr.rel (%p108) target = $region20
      $region19: #{tpu_custom_call.1} parent=5 // pred_region
        // Predicated region
        $region21: #{tpu_custom_call.1} parent=19 // pred_check
          %p111 = pneg %p29
        $region22: #{tpu_custom_call.1} parent=19 // pred_check_branch
          %113 = sbr.rel (%p111) target = $region24
        $region23: #{tpu_custom_call.1} parent=19 // pred_region
          %p114 = scmp.lt.s32.totalorder %s9, 1
          %s115 = scalar_select %p114, %s9, 1
          %s116 = smul.addr %s115, 4
          %s117 = smul.addr %s116, 8
          %s118 = scalar_lea.vmem %s0, %s117
        $region24: #{tpu_custom_call.1} parent=19 // pred_fallthru
          _
      $region20: #{tpu_custom_call.1} parent=5 // pred_fallthru
        _
      %p119 = scmp.le.s32.totalorder 1, %s9
      %p120 = scmp.lt.s32.totalorder %s9, 3
      %p121 = pnand %p119, %p120
      %p122 = pneg %p121
      // Predicated region
      $region25: #{tpu_custom_call.1} parent=5 // pred_check
        _
      $region26: #{tpu_custom_call.1} parent=5 // pred_check_branch
        %124 = sbr.rel (%p121) target = $region28
      $region27: #{tpu_custom_call.1} parent=5 // pred_region
        %s125 = ssub.s32 %s9, 1
        // Predicated region
        $region29: #{tpu_custom_call.1} parent=27 // pred_check
          %p126 = pneg %p56
        $region30: #{tpu_custom_call.1} parent=27 // pred_check_branch
          %128 = sbr.rel (%p126) target = $region32
        $region31: #{tpu_custom_call.1} parent=27 // pred_region
          %130 = dma.done [#allocation3], 16
        $region32: #{tpu_custom_call.1} parent=27 // pred_fallthru
          _
        %131 = sfence
        %p132 = scmp.lt.s32.totalorder %s14, 1
        %s133 = scalar_select %p132, %s14, 1
        %s134 = smul.addr %s133, 4
        %s135 = smul.addr %s134, 8
        %s136 = scalar_lea.vmem %s0, %s135
        %p137 = pneg %p35
        %p138 = pneg %p32
        %p139 = pneg %p56
        %p140 = pneg %p53
        %p141 = pneg %p82
        %p142 = pneg %p79
        %p143 = scmp.lt.s32.totalorder %s14, 1
        %s144 = scalar_select %p143, %s14, 1
        %s145 = smul.addr %s144, 3
        %s146 = smul.addr %s145, 4
        %s147 = scalar_lea.vmem %s2, %s146
        %p148 = scmp.lt.s32.totalorder %s14, 1
        %s149 = scalar_select %p148, %s14, 1
        %s150 = smul.addr %s149, 4
        %s151 = smul.addr %s150, 8
        %s152 = scalar_lea.vmem %s0, %s151
        %p153 = scmp.lt.s32.totalorder %s14, 1
        %s154 = scalar_select %p153, %s14, 1
        %s155 = smul.addr %s154, 3
        %s156 = smul.addr %s155, 4
        %s157 = scalar_lea.vmem %s2, %s156
        %v158 = vlaneseq
        %v159 = vand.u32 %v158, 127
        %v160 = vld [vmem:[%s152] sm:$0x1f]
        %s161 = sld [smem:[#allocation2]]
        %v162 = vstv %s161
        %v163 = vmul.f32 %v162, %v160
        %v164 = vadd.f32 %v163, 0.0
        %s165 = sld [smem:[#allocation2 + $0x24]]
        %v166 = vstv %s165
        %v167 = vmul.f32 %v166, %v160
        %v168 = vadd.f32 %v167, 0.0
        %s169 = sld [smem:[#allocation2 + $0x48]]
        %v170 = vstv %s169
        %v171 = vmul.f32 %v170, %v160
        %v172 = vadd.f32 %v171, 0.0
        %173 = vrot.lane.b32.xlu0 %v160, 127
        %v174 = vpop.permute.xlu0 %173
        %v176 = vrot.slane %v160, 1
        %178 = vrot.lane.b32.xlu0 %v176, 127
        %v179 = vpop.permute.xlu0 %178
        %vm180 = vcmp.lt.s32.totalorder %v159, 127
        %v181 = vsel %vm180, %v174, %v179
        %s182 = sld [smem:[#allocation2 + $0x1]]
        %v183 = vstv %s182
        %v184 = vmul.f32 %v183, %v181
        %v185 = vadd.f32 %v164, %v184
        %s186 = sld [smem:[#allocation2 + $0x25]]
        %v187 = vstv %s186
        %v188 = vmul.f32 %v187, %v181
        %v189 = vadd.f32 %v168, %v188
        %s190 = sld [smem:[#allocation2 + $0x49]]
        %v191 = vstv %s190
        %v192 = vmul.f32 %v191, %v181
        %v193 = vadd.f32 %v172, %v192
        %194 = vrot.lane.b32.xlu0 %v160, 126
        %v195 = vpop.permute.xlu0 %194
        %196 = vrot.lane.b32.xlu0 %v176, 126
        %v197 = vpop.permute.xlu0 %196
        %vm198 = vcmp.lt.s32.totalorder %v159, 126
        %v199 = vsel %vm198, %v195, %v197
        %s200 = sld [smem:[#allocation2 + $0x2]]
        %v201 = vstv %s200
        %v202 = vmul.f32 %v201, %v199
        %v203 = vadd.f32 %v185, %v202
        %s204 = sld [smem:[#allocation2 + $0x26]]
        %v205 = vstv %s204
        %v206 = vmul.f32 %v205, %v199
        %v207 = vadd.f32 %v189, %v206
        %s208 = sld [smem:[#allocation2 + $0x4a]]
        %v209 = vstv %s208
        %v210 = vmul.f32 %v209, %v199
        %v211 = vadd.f32 %v193, %v210
        %212 = vrot.lane.b32.xlu0 %v160, 110
        %v213 = vpop.permute.xlu0 %212
        %214 = vrot.lane.b32.xlu0 %v176, 110
        %v215 = vpop.permute.xlu0 %214
        %vm216 = vcmp.lt.s32.totalorder %v159, 110
        %v217 = vsel %vm216, %v213, %v215
        %s218 = sld [smem:[#allocation2 + $0x3]]
        %v219 = vstv %s218
        %v220 = vmul.f32 %v219, %v217
        %v221 = vadd.f32 %v203, %v220
        %s222 = sld [smem:[#allocation2 + $0x27]]
        %v223 = vstv %s222
        %v224 = vmul.f32 %v223, %v217
        %v225 = vadd.f32 %v207, %v224
        %s226 = sld [smem:[#allocation2 + $0x4b]]
        %v227 = vstv %s226
        %v228 = vmul.f32 %v227, %v217
        %v229 = vadd.f32 %v211, %v228
        %230 = vrot.lane.b32.xlu0 %v160, 109
        %v231 = vpop.permute.xlu0 %230
        %232 = vrot.lane.b32.xlu0 %v176, 109
        %v233 = vpop.permute.xlu0 %232
        %vm234 = vcmp.lt.s32.totalorder %v159, 109
        %v235 = vsel %vm234, %v231, %v233
        %s236 = sld [smem:[#allocation2 + $0x4]]
        %v237 = vstv %s236
        %v238 = vmul.f32 %v237, %v235
        %v239 = vadd.f32 %v221, %v238
        %s240 = sld [smem:[#allocation2 + $0x28]]
        %v241 = vstv %s240
        %v242 = vmul.f32 %v241, %v235
        %v243 = vadd.f32 %v225, %v242
        %s244 = sld [smem:[#allocation2 + $0x4c]]
        %v245 = vstv %s244
        %v246 = vmul.f32 %v245, %v235
        %v247 = vadd.f32 %v229, %v246
        %248 = vrot.lane.b32.xlu0 %v160, 108
        %v249 = vpop.permute.xlu0 %248
        %250 = vrot.lane.b32.xlu0 %v176, 108
        %v251 = vpop.permute.xlu0 %250
        %vm252 = vcmp.lt.s32.totalorder %v159, 108
        %v253 = vsel %vm252, %v249, %v251
        %s254 = sld [smem:[#allocation2 + $0x5]]
        %v255 = vstv %s254
        %v256 = vmul.f32 %v255, %v253
        %v257 = vadd.f32 %v239, %v256
        %s258 = sld [smem:[#allocation2 + $0x29]]
        %v259 = vstv %s258
        %v260 = vmul.f32 %v259, %v253
        %v261 = vadd.f32 %v243, %v260
        %s262 = sld [smem:[#allocation2 + $0x4d]]
        %v263 = vstv %s262
        %v264 = vmul.f32 %v263, %v253
        %v265 = vadd.f32 %v247, %v264
        %266 = vrot.lane.b32.xlu0 %v160, 92
        %v267 = vpop.permute.xlu0 %266
        %268 = vrot.lane.b32.xlu0 %v176, 92
        %v269 = vpop.permute.xlu0 %268
        %vm270 = vcmp.lt.s32.totalorder %v159, 92
        %v271 = vsel %vm270, %v267, %v269
        %s272 = sld [smem:[#allocation2 + $0x6]]
        %v273 = vstv %s272
        %v274 = vmul.f32 %v273, %v271
        %v275 = vadd.f32 %v257, %v274
        %s276 = sld [smem:[#allocation2 + $0x2a]]
        %v277 = vstv %s276
        %v278 = vmul.f32 %v277, %v271
        %v279 = vadd.f32 %v261, %v278
        %s280 = sld [smem:[#allocation2 + $0x4e]]
        %v281 = vstv %s280
        %v282 = vmul.f32 %v281, %v271
        %v283 = vadd.f32 %v265, %v282
        %284 = vrot.lane.b32.xlu0 %v160, 91
        %v285 = vpop.permute.xlu0 %284
        %286 = vrot.lane.b32.xlu0 %v176, 91
        %v287 = vpop.permute.xlu0 %286
        %vm288 = vcmp.lt.s32.totalorder %v159, 91
        %v289 = vsel %vm288, %v285, %v287
        %s290 = sld [smem:[#allocation2 + $0x7]]
        %v291 = vstv %s290
        %v292 = vmul.f32 %v291, %v289
        %v293 = vadd.f32 %v275, %v292
        %s294 = sld [smem:[#allocation2 + $0x2b]]
        %v295 = vstv %s294
        %v296 = vmul.f32 %v295, %v289
        %v297 = vadd.f32 %v279, %v296
        %s298 = sld [smem:[#allocation2 + $0x4f]]
        %v299 = vstv %s298
        %v300 = vmul.f32 %v299, %v289
        %v301 = vadd.f32 %v283, %v300
        %302 = vrot.lane.b32.xlu0 %v160, 90
        %v303 = vpop.permute.xlu0 %302
        %304 = vrot.lane.b32.xlu0 %v176, 90
        %v305 = vpop.permute.xlu0 %304
        %vm306 = vcmp.lt.s32.totalorder %v159, 90
        %v307 = vsel %vm306, %v303, %v305
        %s308 = sld [smem:[#allocation2 + $0x8]]
        %v309 = vstv %s308
        %v310 = vmul.f32 %v309, %v307
        %v311 = vadd.f32 %v293, %v310
        %s312 = sld [smem:[#allocation2 + $0x2c]]
        %v313 = vstv %s312
        %v314 = vmul.f32 %v313, %v307
        %v315 = vadd.f32 %v297, %v314
        %s316 = sld [smem:[#allocation2 + $0x50]]
        %v317 = vstv %s316
        %v318 = vmul.f32 %v317, %v307
        %v319 = vadd.f32 %v301, %v318
        %s320 = scalar_lea.vmem %s152, 8
        %v321 = vld [vmem:[%s320] sm:$0x1f]
        %s322 = sld [smem:[#allocation2 + $0x9]]
        %v323 = vstv %s322
        %v324 = vmul.f32 %v323, %v321
        %v325 = vadd.f32 %v311, %v324
        %s326 = sld [smem:[#allocation2 + $0x2d]]
        %v327 = vstv %s326
        %v328 = vmul.f32 %v327, %v321
        %v329 = vadd.f32 %v315, %v328
        %s330 = sld [smem:[#allocation2 + $0x51]]
        %v331 = vstv %s330
        %v332 = vmul.f32 %v331, %v321
        %v333 = vadd.f32 %v319, %v332
        %334 = vrot.lane.b32.xlu0 %v321, 127
        %v335 = vpop.permute.xlu0 %334
        %v337 = vrot.slane %v321, 1
        %339 = vrot.lane.b32.xlu0 %v337, 127
        %v340 = vpop.permute.xlu0 %339
        %v341 = vsel %vm180, %v335, %v340
        %s342 = sld [smem:[#allocation2 + $0xa]]
        %v343 = vstv %s342
        %v344 = vmul.f32 %v343, %v341
        %v345 = vadd.f32 %v325, %v344
        %s346 = sld [smem:[#allocation2 + $0x2e]]
        %v347 = vstv %s346
        %v348 = vmul.f32 %v347, %v341
        %v349 = vadd.f32 %v329, %v348
        %s350 = sld [smem:[#allocation2 + $0x52]]
        %v351 = vstv %s350
        %v352 = vmul.f32 %v351, %v341
        %v353 = vadd.f32 %v333, %v352
        %354 = vrot.lane.b32.xlu0 %v321, 126
        %v355 = vpop.permute.xlu0 %354
        %356 = vrot.lane.b32.xlu0 %v337, 126
        %v357 = vpop.permute.xlu0 %356
        %v358 = vsel %vm198, %v355, %v357
        %s359 = sld [smem:[#allocation2 + $0xb]]
        %v360 = vstv %s359
        %v361 = vmul.f32 %v360, %v358
        %v362 = vadd.f32 %v345, %v361
        %s363 = sld [smem:[#allocation2 + $0x2f]]
        %v364 = vstv %s363
        %v365 = vmul.f32 %v364, %v358
        %v366 = vadd.f32 %v349, %v365
        %s367 = sld [smem:[#allocation2 + $0x53]]
        %v368 = vstv %s367
        %v369 = vmul.f32 %v368, %v358
        %v370 = vadd.f32 %v353, %v369
        %371 = vrot.lane.b32.xlu0 %v321, 110
        %v372 = vpop.permute.xlu0 %371
        %373 = vrot.lane.b32.xlu0 %v337, 110
        %v374 = vpop.permute.xlu0 %373
        %v375 = vsel %vm216, %v372, %v374
        %s376 = sld [smem:[#allocation2 + $0xc]]
        %v377 = vstv %s376
        %v378 = vmul.f32 %v377, %v375
        %v379 = vadd.f32 %v362, %v378
        %s380 = sld [smem:[#allocation2 + $0x30]]
        %v381 = vstv %s380
        %v382 = vmul.f32 %v381, %v375
        %v383 = vadd.f32 %v366, %v382
        %s384 = sld [smem:[#allocation2 + $0x54]]
        %v385 = vstv %s384
        %v386 = vmul.f32 %v385, %v375
        %v387 = vadd.f32 %v370, %v386
        %388 = vrot.lane.b32.xlu0 %v321, 109
        %v389 = vpop.permute.xlu0 %388
        %390 = vrot.lane.b32.xlu0 %v337, 109
        %v391 = vpop.permute.xlu0 %390
        %v392 = vsel %vm234, %v389, %v391
        %s393 = sld [smem:[#allocation2 + $0xd]]
        %v394 = vstv %s393
        %v395 = vmul.f32 %v394, %v392
        %v396 = vadd.f32 %v379, %v395
        %s397 = sld [smem:[#allocation2 + $0x31]]
        %v398 = vstv %s397
        %v399 = vmul.f32 %v398, %v392
        %v400 = vadd.f32 %v383, %v399
        %s401 = sld [smem:[#allocation2 + $0x55]]
        %v402 = vstv %s401
        %v403 = vmul.f32 %v402, %v392
        %v404 = vadd.f32 %v387, %v403
        %405 = vrot.lane.b32.xlu0 %v321, 108
        %v406 = vpop.permute.xlu0 %405
        %407 = vrot.lane.b32.xlu0 %v337, 108
        %v408 = vpop.permute.xlu0 %407
        %v409 = vsel %vm252, %v406, %v408
        %s410 = sld [smem:[#allocation2 + $0xe]]
        %v411 = vstv %s410
        %v412 = vmul.f32 %v411, %v409
        %v413 = vadd.f32 %v396, %v412
        %s414 = sld [smem:[#allocation2 + $0x32]]
        %v415 = vstv %s414
        %v416 = vmul.f32 %v415, %v409
        %v417 = vadd.f32 %v400, %v416
        %s418 = sld [smem:[#allocation2 + $0x56]]
        %v419 = vstv %s418
        %v420 = vmul.f32 %v419, %v409
        %v421 = vadd.f32 %v404, %v420
        %422 = vrot.lane.b32.xlu0 %v321, 92
        %v423 = vpop.permute.xlu0 %422
        %424 = vrot.lane.b32.xlu0 %v337, 92
        %v425 = vpop.permute.xlu0 %424
        %v426 = vsel %vm270, %v423, %v425
        %s427 = sld [smem:[#allocation2 + $0xf]]
        %v428 = vstv %s427
        %v429 = vmul.f32 %v428, %v426
        %v430 = vadd.f32 %v413, %v429
        %s431 = sld [smem:[#allocation2 + $0x33]]
        %v432 = vstv %s431
        %v433 = vmul.f32 %v432, %v426
        %v434 = vadd.f32 %v417, %v433
        %s435 = sld [smem:[#allocation2 + $0x57]]
        %v436 = vstv %s435
        %v437 = vmul.f32 %v436, %v426
        %v438 = vadd.f32 %v421, %v437
        %439 = vrot.lane.b32.xlu0 %v321, 91
        %v440 = vpop.permute.xlu0 %439
        %441 = vrot.lane.b32.xlu0 %v337, 91
        %v442 = vpop.permute.xlu0 %441
        %v443 = vsel %vm288, %v440, %v442
        %s444 = sld [smem:[#allocation2 + $0x10]]
        %v445 = vstv %s444
        %v446 = vmul.f32 %v445, %v443
        %v447 = vadd.f32 %v430, %v446
        %s448 = sld [smem:[#allocation2 + $0x34]]
        %v449 = vstv %s448
        %v450 = vmul.f32 %v449, %v443
        %v451 = vadd.f32 %v434, %v450
        %s452 = sld [smem:[#allocation2 + $0x58]]
        %v453 = vstv %s452
        %v454 = vmul.f32 %v453, %v443
        %v455 = vadd.f32 %v438, %v454
        %456 = vrot.lane.b32.xlu0 %v321, 90
        %v457 = vpop.permute.xlu0 %456
        %458 = vrot.lane.b32.xlu0 %v337, 90
        %v459 = vpop.permute.xlu0 %458
        %v460 = vsel %vm306, %v457, %v459
        %s461 = sld [smem:[#allocation2 + $0x11]]
        %v462 = vstv %s461
        %v463 = vmul.f32 %v462, %v460
        %v464 = vadd.f32 %v447, %v463
        %s465 = sld [smem:[#allocation2 + $0x35]]
        %v466 = vstv %s465
        %v467 = vmul.f32 %v466, %v460
        %v468 = vadd.f32 %v451, %v467
        %s469 = sld [smem:[#allocation2 + $0x59]]
        %v470 = vstv %s469
        %v471 = vmul.f32 %v470, %v460
        %v472 = vadd.f32 %v455, %v471
        %s473 = scalar_lea.vmem %s152, 16
        %v474 = vld [vmem:[%s473] sm:$0x1f]
        %s475 = sld [smem:[#allocation2 + $0x12]]
        %v476 = vstv %s475
        %v477 = vmul.f32 %v476, %v474
        %v478 = vadd.f32 %v464, %v477
        %s479 = sld [smem:[#allocation2 + $0x36]]
        %v480 = vstv %s479
        %v481 = vmul.f32 %v480, %v474
        %v482 = vadd.f32 %v468, %v481
        %s483 = sld [smem:[#allocation2 + $0x5a]]
        %v484 = vstv %s483
        %v485 = vmul.f32 %v484, %v474
        %v486 = vadd.f32 %v472, %v485
        %487 = vrot.lane.b32.xlu0 %v474, 127
        %v488 = vpop.permute.xlu0 %487
        %v490 = vrot.slane %v474, 1
        %492 = vrot.lane.b32.xlu0 %v490, 127
        %v493 = vpop.permute.xlu0 %492
        %v494 = vsel %vm180, %v488, %v493
        %s495 = sld [smem:[#allocation2 + $0x13]]
        %v496 = vstv %s495
        %v497 = vmul.f32 %v496, %v494
        %v498 = vadd.f32 %v478, %v497
        %s499 = sld [smem:[#allocation2 + $0x37]]
        %v500 = vstv %s499
        %v501 = vmul.f32 %v500, %v494
        %v502 = vadd.f32 %v482, %v501
        %s503 = sld [smem:[#allocation2 + $0x5b]]
        %v504 = vstv %s503
        %v505 = vmul.f32 %v504, %v494
        %v506 = vadd.f32 %v486, %v505
        %507 = vrot.lane.b32.xlu0 %v474, 126
        %v508 = vpop.permute.xlu0 %507
        %509 = vrot.lane.b32.xlu0 %v490, 126
        %v510 = vpop.permute.xlu0 %509
        %v511 = vsel %vm198, %v508, %v510
        %s512 = sld [smem:[#allocation2 + $0x14]]
        %v513 = vstv %s512
        %v514 = vmul.f32 %v513, %v511
        %v515 = vadd.f32 %v498, %v514
        %s516 = sld [smem:[#allocation2 + $0x38]]
        %v517 = vstv %s516
        %v518 = vmul.f32 %v517, %v511
        %v519 = vadd.f32 %v502, %v518
        %s520 = sld [smem:[#allocation2 + $0x5c]]
        %v521 = vstv %s520
        %v522 = vmul.f32 %v521, %v511
        %v523 = vadd.f32 %v506, %v522
        %524 = vrot.lane.b32.xlu0 %v474, 110
        %v525 = vpop.permute.xlu0 %524
        %526 = vrot.lane.b32.xlu0 %v490, 110
        %v527 = vpop.permute.xlu0 %526
        %v528 = vsel %vm216, %v525, %v527
        %s529 = sld [smem:[#allocation2 + $0x15]]
        %v530 = vstv %s529
        %v531 = vmul.f32 %v530, %v528
        %v532 = vadd.f32 %v515, %v531
        %s533 = sld [smem:[#allocation2 + $0x39]]
        %v534 = vstv %s533
        %v535 = vmul.f32 %v534, %v528
        %v536 = vadd.f32 %v519, %v535
        %s537 = sld [smem:[#allocation2 + $0x5d]]
        %v538 = vstv %s537
        %v539 = vmul.f32 %v538, %v528
        %v540 = vadd.f32 %v523, %v539
        %541 = vrot.lane.b32.xlu0 %v474, 109
        %v542 = vpop.permute.xlu0 %541
        %543 = vrot.lane.b32.xlu0 %v490, 109
        %v544 = vpop.permute.xlu0 %543
        %v545 = vsel %vm234, %v542, %v544
        %s546 = sld [smem:[#allocation2 + $0x16]]
        %v547 = vstv %s546
        %v548 = vmul.f32 %v547, %v545
        %v549 = vadd.f32 %v532, %v548
        %s550 = sld [smem:[#allocation2 + $0x3a]]
        %v551 = vstv %s550
        %v552 = vmul.f32 %v551, %v545
        %v553 = vadd.f32 %v536, %v552
        %s554 = sld [smem:[#allocation2 + $0x5e]]
        %v555 = vstv %s554
        %v556 = vmul.f32 %v555, %v545
        %v557 = vadd.f32 %v540, %v556
        %558 = vrot.lane.b32.xlu0 %v474, 108
        %v559 = vpop.permute.xlu0 %558
        %560 = vrot.lane.b32.xlu0 %v490, 108
        %v561 = vpop.permute.xlu0 %560
        %v562 = vsel %vm252, %v559, %v561
        %s563 = sld [smem:[#allocation2 + $0x17]]
        %v564 = vstv %s563
        %v565 = vmul.f32 %v564, %v562
        %v566 = vadd.f32 %v549, %v565
        %s567 = sld [smem:[#allocation2 + $0x3b]]
        %v568 = vstv %s567
        %v569 = vmul.f32 %v568, %v562
        %v570 = vadd.f32 %v553, %v569
        %s571 = sld [smem:[#allocation2 + $0x5f]]
        %v572 = vstv %s571
        %v573 = vmul.f32 %v572, %v562
        %v574 = vadd.f32 %v557, %v573
        %575 = vrot.lane.b32.xlu0 %v474, 92
        %v576 = vpop.permute.xlu0 %575
        %577 = vrot.lane.b32.xlu0 %v490, 92
        %v578 = vpop.permute.xlu0 %577
        %v579 = vsel %vm270, %v576, %v578
        %s580 = sld [smem:[#allocation2 + $0x18]]
        %v581 = vstv %s580
        %v582 = vmul.f32 %v581, %v579
        %v583 = vadd.f32 %v566, %v582
        %s584 = sld [smem:[#allocation2 + $0x3c]]
        %v585 = vstv %s584
        %v586 = vmul.f32 %v585, %v579
        %v587 = vadd.f32 %v570, %v586
        %s588 = sld [smem:[#allocation2 + $0x60]]
        %v589 = vstv %s588
        %v590 = vmul.f32 %v589, %v579
        %v591 = vadd.f32 %v574, %v590
        %592 = vrot.lane.b32.xlu0 %v474, 91
        %v593 = vpop.permute.xlu0 %592
        %594 = vrot.lane.b32.xlu0 %v490, 91
        %v595 = vpop.permute.xlu0 %594
        %v596 = vsel %vm288, %v593, %v595
        %s597 = sld [smem:[#allocation2 + $0x19]]
        %v598 = vstv %s597
        %v599 = vmul.f32 %v598, %v596
        %v600 = vadd.f32 %v583, %v599
        %s601 = sld [smem:[#allocation2 + $0x3d]]
        %v602 = vstv %s601
        %v603 = vmul.f32 %v602, %v596
        %v604 = vadd.f32 %v587, %v603
        %s605 = sld [smem:[#allocation2 + $0x61]]
        %v606 = vstv %s605
        %v607 = vmul.f32 %v606, %v596
        %v608 = vadd.f32 %v591, %v607
        %609 = vrot.lane.b32.xlu0 %v474, 90
        %v610 = vpop.permute.xlu0 %609
        %611 = vrot.lane.b32.xlu0 %v490, 90
        %v612 = vpop.permute.xlu0 %611
        %v613 = vsel %vm306, %v610, %v612
        %s614 = sld [smem:[#allocation2 + $0x1a]]
        %v615 = vstv %s614
        %v616 = vmul.f32 %v615, %v613
        %v617 = vadd.f32 %v600, %v616
        %s618 = sld [smem:[#allocation2 + $0x3e]]
        %v619 = vstv %s618
        %v620 = vmul.f32 %v619, %v613
        %v621 = vadd.f32 %v604, %v620
        %s622 = sld [smem:[#allocation2 + $0x62]]
        %v623 = vstv %s622
        %v624 = vmul.f32 %v623, %v613
        %v625 = vadd.f32 %v608, %v624
        %s626 = scalar_lea.vmem %s152, 24
        %v627 = vld [vmem:[%s626] sm:$0x1f]
        %s628 = sld [smem:[#allocation2 + $0x1b]]
        %v629 = vstv %s628
        %v630 = vmul.f32 %v629, %v627
        %v631 = vadd.f32 %v617, %v630
        %s632 = sld [smem:[#allocation2 + $0x3f]]
        %v633 = vstv %s632
        %v634 = vmul.f32 %v633, %v627
        %v635 = vadd.f32 %v621, %v634
        %s636 = sld [smem:[#allocation2 + $0x63]]
        %v637 = vstv %s636
        %v638 = vmul.f32 %v637, %v627
        %v639 = vadd.f32 %v625, %v638
        %640 = vrot.lane.b32.xlu0 %v627, 127
        %v641 = vpop.permute.xlu0 %640
        %v643 = vrot.slane %v627, 1
        %645 = vrot.lane.b32.xlu0 %v643, 127
        %v646 = vpop.permute.xlu0 %645
        %v647 = vsel %vm180, %v641, %v646
        %s648 = sld [smem:[#allocation2 + $0x1c]]
        %v649 = vstv %s648
        %v650 = vmul.f32 %v649, %v647
        %v651 = vadd.f32 %v631, %v650
        %s652 = sld [smem:[#allocation2 + $0x40]]
        %v653 = vstv %s652
        %v654 = vmul.f32 %v653, %v647
        %v655 = vadd.f32 %v635, %v654
        %s656 = sld [smem:[#allocation2 + $0x64]]
        %v657 = vstv %s656
        %v658 = vmul.f32 %v657, %v647
        %v659 = vadd.f32 %v639, %v658
        %660 = vrot.lane.b32.xlu0 %v627, 126
        %v661 = vpop.permute.xlu0 %660
        %662 = vrot.lane.b32.xlu0 %v643, 126
        %v663 = vpop.permute.xlu0 %662
        %v664 = vsel %vm198, %v661, %v663
        %s665 = sld [smem:[#allocation2 + $0x1d]]
        %v666 = vstv %s665
        %v667 = vmul.f32 %v666, %v664
        %v668 = vadd.f32 %v651, %v667
        %s669 = sld [smem:[#allocation2 + $0x41]]
        %v670 = vstv %s669
        %v671 = vmul.f32 %v670, %v664
        %v672 = vadd.f32 %v655, %v671
        %s673 = sld [smem:[#allocation2 + $0x65]]
        %v674 = vstv %s673
        %v675 = vmul.f32 %v674, %v664
        %v676 = vadd.f32 %v659, %v675
        %677 = vrot.lane.b32.xlu0 %v627, 110
        %v678 = vpop.permute.xlu0 %677
        %679 = vrot.lane.b32.xlu0 %v643, 110
        %v680 = vpop.permute.xlu0 %679
        %v681 = vsel %vm216, %v678, %v680
        %s682 = sld [smem:[#allocation2 + $0x1e]]
        %v683 = vstv %s682
        %v684 = vmul.f32 %v683, %v681
        %v685 = vadd.f32 %v668, %v684
        %s686 = sld [smem:[#allocation2 + $0x42]]
        %v687 = vstv %s686
        %v688 = vmul.f32 %v687, %v681
        %v689 = vadd.f32 %v672, %v688
        %s690 = sld [smem:[#allocation2 + $0x66]]
        %v691 = vstv %s690
        %v692 = vmul.f32 %v691, %v681
        %v693 = vadd.f32 %v676, %v692
        %694 = vrot.lane.b32.xlu0 %v627, 109
        %v695 = vpop.permute.xlu0 %694
        %696 = vrot.lane.b32.xlu0 %v643, 109
        %v697 = vpop.permute.xlu0 %696
        %v698 = vsel %vm234, %v695, %v697
        %s699 = sld [smem:[#allocation2 + $0x1f]]
        %v700 = vstv %s699
        %v701 = vmul.f32 %v700, %v698
        %v702 = vadd.f32 %v685, %v701
        %s703 = sld [smem:[#allocation2 + $0x43]]
        %v704 = vstv %s703
        %v705 = vmul.f32 %v704, %v698
        %v706 = vadd.f32 %v689, %v705
        %s707 = sld [smem:[#allocation2 + $0x67]]
        %v708 = vstv %s707
        %v709 = vmul.f32 %v708, %v698
        %v710 = vadd.f32 %v693, %v709
        %711 = vrot.lane.b32.xlu0 %v627, 108
        %v712 = vpop.permute.xlu0 %711
        %713 = vrot.lane.b32.xlu0 %v643, 108
        %v714 = vpop.permute.xlu0 %713
        %v715 = vsel %vm252, %v712, %v714
        %s716 = sld [smem:[#allocation2 + $0x20]]
        %v717 = vstv %s716
        %v718 = vmul.f32 %v717, %v715
        %v719 = vadd.f32 %v702, %v718
        %s720 = sld [smem:[#allocation2 + $0x44]]
        %v721 = vstv %s720
        %v722 = vmul.f32 %v721, %v715
        %v723 = vadd.f32 %v706, %v722
        %s724 = sld [smem:[#allocation2 + $0x68]]
        %v725 = vstv %s724
        %v726 = vmul.f32 %v725, %v715
        %v727 = vadd.f32 %v710, %v726
        %728 = vrot.lane.b32.xlu0 %v627, 92
        %v729 = vpop.permute.xlu0 %728
        %730 = vrot.lane.b32.xlu0 %v643, 92
        %v731 = vpop.permute.xlu0 %730
        %v732 = vsel %vm270, %v729, %v731
        %s733 = sld [smem:[#allocation2 + $0x21]]
        %v734 = vstv %s733
        %v735 = vmul.f32 %v734, %v732
        %v736 = vadd.f32 %v719, %v735
        %s737 = sld [smem:[#allocation2 + $0x45]]
        %v738 = vstv %s737
        %v739 = vmul.f32 %v738, %v732
        %v740 = vadd.f32 %v723, %v739
        %s741 = sld [smem:[#allocation2 + $0x69]]
        %v742 = vstv %s741
        %v743 = vmul.f32 %v742, %v732
        %v744 = vadd.f32 %v727, %v743
        %745 = vrot.lane.b32.xlu0 %v627, 91
        %v746 = vpop.permute.xlu0 %745
        %747 = vrot.lane.b32.xlu0 %v643, 91
        %v748 = vpop.permute.xlu0 %747
        %v749 = vsel %vm288, %v746, %v748
        %s750 = sld [smem:[#allocation2 + $0x22]]
        %v751 = vstv %s750
        %v752 = vmul.f32 %v751, %v749
        %v753 = vadd.f32 %v736, %v752
        %s754 = sld [smem:[#allocation2 + $0x46]]
        %v755 = vstv %s754
        %v756 = vmul.f32 %v755, %v749
        %v757 = vadd.f32 %v740, %v756
        %s758 = sld [smem:[#allocation2 + $0x6a]]
        %v759 = vstv %s758
        %v760 = vmul.f32 %v759, %v749
        %v761 = vadd.f32 %v744, %v760
        %762 = vrot.lane.b32.xlu0 %v627, 90
        %v763 = vpop.permute.xlu0 %762
        %764 = vrot.lane.b32.xlu0 %v643, 90
        %v765 = vpop.permute.xlu0 %764
        %v766 = vsel %vm306, %v763, %v765
        %s767 = sld [smem:[#allocation2 + $0x23]]
        %v768 = vstv %s767
        %v769 = vmul.f32 %v768, %v766
        %v770 = vadd.f32 %v753, %v769
        %s771 = sld [smem:[#allocation2 + $0x47]]
        %v772 = vstv %s771
        %v773 = vmul.f32 %v772, %v766
        %v774 = vadd.f32 %v757, %v773
        %s775 = sld [smem:[#allocation2 + $0x6b]]
        %v776 = vstv %s775
        %v777 = vmul.f32 %v776, %v766
        %v778 = vadd.f32 %v761, %v777
        %v779 = vtanh.pop %v770
        %780 = vst [vmem:[%s157] sm:$0x7] %v779
        %v781 = vtanh.pop %v774
        %s782 = scalar_lea.vmem %s157, 4
        %783 = vst [vmem:[%s782] sm:$0x7] %v781
        %v784 = vtanh.pop %v778
        %s785 = scalar_lea.vmem %s157, 8
        %786 = vst [vmem:[%s785] sm:$0x7] %v784
        %p787 = scmp.lt.s32.totalorder %s14, 1
        %s788 = scalar_select %p787, %s14, 1
        %s789 = smul.addr %s788, 3
        %s790 = smul.addr %s789, 4
        %s791 = scalar_lea.vmem %s2, %s790
        // Predicated region
        $region33: #{tpu_custom_call.1} parent=27 // pred_check
          %p792 = pneg %p79
        $region34: #{tpu_custom_call.1} parent=27 // pred_check_branch
          %794 = sbr.rel (%p792) target = $region36
        $region35: #{tpu_custom_call.1} parent=27 // pred_region
          _
        $region36: #{tpu_custom_call.1} parent=27 // pred_fallthru
          _
      $region28: #{tpu_custom_call.1} parent=5 // pred_fallthru
        _
      %p795 = scmp.le.s32.totalorder 2, %s9
      // Predicated region
      $region37: #{tpu_custom_call.1} parent=5 // pred_check
        %p796 = pneg %p795
      $region38: #{tpu_custom_call.1} parent=5 // pred_check_branch
        %798 = sbr.rel (%p796) target = $region40
      $region39: #{tpu_custom_call.1} parent=5 // pred_region
        %s799 = ssub.s32 %s9, 2
        // Predicated region
        $region41: #{tpu_custom_call.1} parent=39 // pred_check
          %p800 = pneg %p85
        $region42: #{tpu_custom_call.1} parent=39 // pred_check_branch
          %802 = sbr.rel (%p800) target = $region44
        $region43: #{tpu_custom_call.1} parent=39 // pred_region
          %p803 = scmp.lt.s32.totalorder %s15, 1
          %s804 = scalar_select %p803, %s15, 1
          %s805 = smul.addr %s804, 3
          %s806 = smul.addr %s805, 4
          %s807 = scalar_lea.vmem %s2, %s806
        $region44: #{tpu_custom_call.1} parent=39 // pred_fallthru
          _
      $region40: #{tpu_custom_call.1} parent=5 // pred_fallthru
        _
    $region6: #{tpu_custom_call.1} parent=1 // loop_footer
      %s13 = sadd.s32 1, %s9
    $region7: #{tpu_custom_call.1} parent=1 // loop_footer_branch
      %8 = sbr.rel target = $region3
    $region8: #{tpu_custom_call.1} parent=1 // loop_exit
      _
    %808 = vsyncpa [#allocation3], 1
    %s809 = scalar_lea.sflag [#allocation3], 1
    %810 = vsyncpa %s809, 1

</llo_original>
